<compile_context>
chip_gen: v7x
topology: tpu7x:2x2x1
jax: 0.10.0
libtpu: 0.0.40
codegen_flags: <defaults>
</compile_context>

<pallas_src>
import functools

import jax
import jax.numpy as jnp
import numpy as np
from jax.experimental import pallas as pl
from jax.experimental.pallas import tpu as pltpu


def _model_kernel(x_ref, mask_ref, w1_ref, b1_ref, w2_ref, b2_ref,
                  w3_ref, b3_ref, w4_ref, b4_ref, out_ref,
                  pad_ref, a_ref, *, H, W):
    f32 = jnp.float32
    Wp = W + 3                      # padded-grid row stride == output row stride
    ncore = (H + 3) * Wp            # all even-position output rows incl. output_padding

    x = x_ref[0]                                                    # (8, Lp)

    # ---- layer 1: grouped 1x1 convT (4 -> 32) + ReLU (on the whole padded grid) ----
    v2 = jnp.maximum(
        jnp.dot(w1_ref[...], x, preferred_element_type=f32) + b1_ref[...], 0.0)

    # ---- layer 2: 1x1 convT (32 -> 16) + sigmoid; mask zeroes the pad positions ----
    # pad_ref then holds exactly the zero-padded input grid of the 3x3 transposed conv.
    pad_ref[...] = (
        jax.nn.sigmoid(jnp.dot(w2_ref[...], v2, preferred_element_type=f32)
                       + b2_ref[...]) * mask_ref[...])

    # ---- layer 3: 3x3 grouped convT (16 -> 32) as ONE K=144 dot ----
    # Because the flat pad-grid row stride equals the output row stride, tap
    # (a, b) is a single lane-offset slice starting at a*Wp + b; reads that run
    # past a row's right pad wrap into the next row's left pad (zeros), so the
    # output_padding row/col come out as bias-only automatically.
    for t in range(9):
        a, b = divmod(t, 3)
        s = a * Wp + b
        a_ref[16 * t:16 * (t + 1), :] = pad_ref[:, s:s + ncore]
    v6 = jax.nn.sigmoid(
        jnp.dot(w3_ref[...], a_ref[...], preferred_element_type=f32) + b3_ref[...])

    # ---- layer 4: 1x1 convT (32 -> 64), stride 2 — dense (even-position) part ----
    out_ref[0] = jax.nn.sigmoid(
        jnp.dot(w4_ref[...], v6, preferred_element_type=f32) + b4_ref[...])


def init_raw_params(key):
    """PyTorch-layout parameters with a ConvTranspose2d-style uniform init."""
    ks = jax.random.split(key, 8)

    def u(k, shape, fan):
        bound = 1.0 / np.sqrt(fan)
        return jax.random.uniform(k, shape, jnp.float32, -bound, bound)

    return dict(
        w1=u(ks[0], (4, 8, 1, 1), 8),       b1=u(ks[1], (32,), 8),
        w2=u(ks[2], (32, 16, 1, 1), 16),    b2=u(ks[3], (16,), 16),
        w3=u(ks[4], (16, 8, 3, 3), 8 * 9),  b3=u(ks[5], (32,), 8 * 9),
        w4=u(ks[6], (32, 64, 1, 1), 64),    b4=u(ks[7], (64,), 64),
    )


def _w3_full(w3):
    """(16, 8, 3, 3) grouped weight -> dense block-diagonal (16, 32, 3, 3)."""
    full = jnp.zeros((16, 32, 3, 3), jnp.float32)
    for ci in range(16):
        g = ci // 4
        full = full.at[ci, 8 * g:8 * g + 8].set(w3[ci])
    return full


def pack_params(raw):
    """Repack PyTorch-layout params into the kernel's lane-dense layout."""
    # layer 1: (32, 8) matrix; column g holds the per-output scale of input ch g
    # (columns 4..7 stay zero; the input channel axis is zero-padded to 8).
    w1 = raw["w1"][:, :, 0, 0]                               # (4, 8)
    w1e = jnp.zeros((32, 8), jnp.float32)
    for g in range(4):
        w1e = w1e.at[8 * g:8 * g + 8, g].set(w1[g])

    # layer 3: flipped taps packed along K: W3pack[co, 16*t + ci], t = 3a + b.
    full = _w3_full(raw["w3"])
    w3p = jnp.zeros((32, 144), jnp.float32)
    for a in range(3):
        for b in range(3):
            t = 3 * a + b
            w3p = w3p.at[:, 16 * t:16 * (t + 1)].set(full[:, :, 2 - a, 2 - b].T)

    return dict(
        w1=w1e,                      b1=raw["b1"].reshape(32, 1),
        w2=raw["w2"][:, :, 0, 0].T,  b2=raw["b2"].reshape(16, 1),
        w3=w3p,                      b3=raw["b3"].reshape(32, 1),
        w4=raw["w4"][:, :, 0, 0].T,  b4=raw["b4"].reshape(64, 1),
    )


def _forward_impl(x, params):
    """x: (N, 4, H, W) float32, NCHW.  Returns (N, 64, 2*(H+3)-1, 2*(W+3)-1)."""
    N, C, H, W = x.shape
    assert C == 4
    Wp = W + 3
    Lp = (H + 6) * Wp                # 2 top / 4 bottom pad rows, 2 left / 1 right pad cols
    Hc, Wc = H + 3, W + 3            # even-position output grid (incl. output_padding)
    ncore = Hc * Wp                  # == Hc * Wc

    # Drop x straight into the zero-padded transposed-conv grid and pad channels
    # 4 -> 8 so the layer-1 dot has an aligned K (one fused XLA pad, ~2x input bytes).
    xp = jnp.pad(x.astype(jnp.float32), ((0, 0), (0, 4), (2, 4), (2, 1)))
    xp = xp.reshape(N, 8, Lp)

    # 0/1 mask of the data positions inside the flat padded grid.
    mask = jnp.pad(jnp.ones((H, W), jnp.float32), ((2, 4), (2, 1))).reshape(1, Lp)

    kernel = functools.partial(_model_kernel, H=H, W=W)

    dense_flat = pl.pallas_call(
        kernel,
        out_shape=jax.ShapeDtypeStruct((N, 64, ncore), jnp.float32),
        grid_spec=pltpu.PrefetchScalarGridSpec(
            num_scalar_prefetch=0,
            grid=(N,),
            in_specs=[
                pl.BlockSpec((1, 8, Lp), lambda n: (n, 0, 0)),
                pl.BlockSpec((1, Lp), lambda n: (0, 0)),
                pl.BlockSpec((32, 8), lambda n: (0, 0)),
                pl.BlockSpec((32, 1), lambda n: (0, 0)),
                pl.BlockSpec((16, 32), lambda n: (0, 0)),
                pl.BlockSpec((16, 1), lambda n: (0, 0)),
                pl.BlockSpec((32, 144), lambda n: (0, 0)),
                pl.BlockSpec((32, 1), lambda n: (0, 0)),
                pl.BlockSpec((64, 32), lambda n: (0, 0)),
                pl.BlockSpec((64, 1), lambda n: (0, 0)),
            ],
            out_specs=pl.BlockSpec((1, 64, ncore), lambda n: (n, 0, 0)),
            scratch_shapes=[
                pltpu.VMEM((16, Lp), jnp.float32),      # zero-padded v4 grid
                pltpu.VMEM((144, ncore), jnp.float32),  # im2col (9 taps x 16 ch)
            ],
        ),
        compiler_params=pltpu.CompilerParams(dimension_semantics=("parallel",)),
    )(xp, mask,
      params["w1"], params["b1"], params["w2"], params["b2"],
      params["w3"], params["b3"], params["w4"], params["b4"])

    # Stride-2 interleave of the dense (even, even) grid with sigmoid(bias4):
    # two stack+reshape passes — no transpose, no concat, no strided scatter.
    dense = dense_flat.reshape(N, 64, Hc, Wc)
    Hout, Wout = 2 * Hc - 1, 2 * Wc - 1
    fill = jax.nn.sigmoid(params["b4"].reshape(64))
    fill_w = jnp.broadcast_to(fill[None, :, None, None], (N, 64, Hc, Wc))
    cols = jnp.stack([dense, fill_w], axis=-1).reshape(N, 64, Hc, 2 * Wc)[..., :Wout]
    fill_h = jnp.broadcast_to(fill[None, :, None, None], (N, 64, Hc, Wout))
    out = jnp.stack([cols, fill_h], axis=-2).reshape(N, 64, 2 * Hc, Wout)[:, :, :Hout, :]
    return out


model_forward = jax.jit(_forward_impl)


def reference_forward(x, raw):
    """Pure-JAX (XLA) reference of the same forward pass, NCHW."""
    N, _, H, W = x.shape
    hi = jax.lax.Precision.HIGHEST

    w1 = raw["w1"][:, :, 0, 0]                               # (4, 8)
    v1 = (x[:, :, None] * w1[None, :, :, None, None]).reshape(N, 32, H, W)
    v2 = jnp.maximum(v1 + raw["b1"][None, :, None, None], 0.0)

    v3 = jnp.einsum("nihw,io->nohw", v2, raw["w2"][:, :, 0, 0], precision=hi)
    v4 = jax.nn.sigmoid(v3 + raw["b2"][None, :, None, None])

    full = _w3_full(raw["w3"])
    Hc, Wc = H + 3, W + 3
    v5 = jnp.zeros((N, 32, Hc, Wc), jnp.float32)
    for ky in range(3):
        for kx in range(3):
            contrib = jnp.einsum("nihw,io->nohw", v4, full[:, :, ky, kx], precision=hi)
            v5 = v5.at[:, :, ky:ky + H, kx:kx + W].add(contrib)
    v6 = jax.nn.sigmoid(v5 + raw["b3"][None, :, None, None])

    d = jnp.einsum("nihw,io->nohw", v6, raw["w4"][:, :, 0, 0], precision=hi)
    d = d + raw["b4"][None, :, None, None]
    Hout, Wout = 2 * Hc - 1, 2 * Wc - 1
    out = jnp.broadcast_to(raw["b4"][None, :, None, None], (N, 64, Hout, Wout))
    out = out.at[:, :, ::2, ::2].set(d)
    return jax.nn.sigmoid(out)


if __name__ == "__main__":
    N, H, W = 2, 16, 16
    key = jax.random.PRNGKey(0)
    kx, kp = jax.random.split(key)
    x = jax.random.normal(kx, (N, 4, H, W), jnp.float32)

    raw = init_raw_params(kp)
    params = pack_params(raw)

    out = jax.block_until_ready(model_forward(x, params))
    assert out.shape == (N, 64, 2 * (H + 3) - 1, 2 * (W + 3) - 1), out.shape
    assert bool(jnp.isfinite(out).all())

    ref = jax.block_until_ready(reference_forward(x, raw))
    max_err = float(jnp.max(jnp.abs(out - ref)))
    assert max_err < 3e-2, f"kernel/reference mismatch: max abs err = {max_err}"
    print("KERNEL_OK")
</pallas_src>

<mosaic_0001>
module attributes {stable_mosaic.version = 11 : i64} {
  func.func @_model_kernel(%arg0: i32, %arg1: memref<1x8x418xf32, #tpu.memory_space<vmem>>, %arg2: memref<1x418xf32, #tpu.memory_space<vmem>>, %arg3: memref<32x8xf32, #tpu.memory_space<vmem>>, %arg4: memref<32x1xf32, #tpu.memory_space<vmem>>, %arg5: memref<16x32xf32, #tpu.memory_space<vmem>>, %arg6: memref<16x1xf32, #tpu.memory_space<vmem>>, %arg7: memref<32x144xf32, #tpu.memory_space<vmem>>, %arg8: memref<32x1xf32, #tpu.memory_space<vmem>>, %arg9: memref<64x32xf32, #tpu.memory_space<vmem>>, %arg10: memref<64x1xf32, #tpu.memory_space<vmem>>, %arg11: memref<1x64x361xf32, #tpu.memory_space<vmem>>, %arg12: memref<16x418xf32, #tpu.memory_space<vmem>>, %arg13: memref<144x361xf32, #tpu.memory_space<vmem>>) attributes {dimension_semantics = [#tpu.dimension_semantics<parallel>], iteration_bounds = array<i64: 2>, scalar_prefetch = 0 : i64, scratch_operands = 2 : i64, tpu.core_type = #tpu.core_type<tc>, window_params = [{transform_indices = @transform_0, window_bounds = array<i64: 1, 8, 418>}, {pipeline_mode = #tpu.pipeline_mode<synchronous>, transform_indices = @transform_1, window_bounds = array<i64: 1, 418>}, {pipeline_mode = #tpu.pipeline_mode<synchronous>, transform_indices = @transform_2, window_bounds = array<i64: 32, 8>}, {pipeline_mode = #tpu.pipeline_mode<synchronous>, transform_indices = @transform_3, window_bounds = array<i64: 32, 1>}, {pipeline_mode = #tpu.pipeline_mode<synchronous>, transform_indices = @transform_4, window_bounds = array<i64: 16, 32>}, {pipeline_mode = #tpu.pipeline_mode<synchronous>, transform_indices = @transform_5, window_bounds = array<i64: 16, 1>}, {pipeline_mode = #tpu.pipeline_mode<synchronous>, transform_indices = @transform_6, window_bounds = array<i64: 32, 144>}, {pipeline_mode = #tpu.pipeline_mode<synchronous>, transform_indices = @transform_7, window_bounds = array<i64: 32, 1>}, {pipeline_mode = #tpu.pipeline_mode<synchronous>, transform_indices = @transform_8, window_bounds = array<i64: 64, 32>}, {pipeline_mode = #tpu.pipeline_mode<synchronous>, transform_indices = @transform_9, window_bounds = array<i64: 64, 1>}, {transform_indices = @transform_10, window_bounds = array<i64: 1, 64, 361>}]} {
    %c0 = arith.constant 0 : index
    %c0_0 = arith.constant 0 : index
    %c0_1 = arith.constant 0 : index
    %0 = vector.load %arg1[%c0, %c0_0, %c0_1] : memref<1x8x418xf32, #tpu.memory_space<vmem>>, vector<1x8x418xf32>
    %1 = vector.shape_cast %0 : vector<1x8x418xf32> to vector<8x418xf32>
    %c0_2 = arith.constant 0 : index
    %c0_3 = arith.constant 0 : index
    %2 = vector.load %arg3[%c0_2, %c0_3] : memref<32x8xf32, #tpu.memory_space<vmem>>, vector<32x8xf32>
    %cst = arith.constant dense<0.000000e+00> : vector<32x418xf32>
    %3 = tpu.matmul %2, %1, %cst {dimension_numbers = #tpu.dot_dimension_numbers<[1], [0], [0], [1], [0, 0, 1, 1], [], []>} : vector<32x8xf32>, vector<8x418xf32>, vector<32x418xf32> -> vector<32x418xf32>
    %c0_4 = arith.constant 0 : index
    %c0_5 = arith.constant 0 : index
    %4 = vector.load %arg4[%c0_4, %c0_5] : memref<32x1xf32, #tpu.memory_space<vmem>>, vector<32x1xf32>
    %5 = vector.broadcast %4 : vector<32x1xf32> to vector<32x418xf32>
    %6 = arith.addf %3, %5 : vector<32x418xf32>
    %cst_6 = arith.constant 0.000000e+00 : f32
    %7 = vector.broadcast %cst_6 : f32 to vector<32x418xf32>
    %8 = arith.maximumf %6, %7 : vector<32x418xf32>
    %c0_7 = arith.constant 0 : index
    %c0_8 = arith.constant 0 : index
    %9 = vector.load %arg5[%c0_7, %c0_8] : memref<16x32xf32, #tpu.memory_space<vmem>>, vector<16x32xf32>
    %cst_9 = arith.constant dense<0.000000e+00> : vector<16x418xf32>
    %10 = tpu.matmul %9, %8, %cst_9 {dimension_numbers = #tpu.dot_dimension_numbers<[1], [0], [0], [1], [0, 0, 1, 1], [], []>} : vector<16x32xf32>, vector<32x418xf32>, vector<16x418xf32> -> vector<16x418xf32>
    %c0_10 = arith.constant 0 : index
    %c0_11 = arith.constant 0 : index
    %11 = vector.load %arg6[%c0_10, %c0_11] : memref<16x1xf32, #tpu.memory_space<vmem>>, vector<16x1xf32>
    %12 = vector.broadcast %11 : vector<16x1xf32> to vector<16x418xf32>
    %13 = arith.addf %10, %12 : vector<16x418xf32>
    %14 = arith.negf %13 : vector<16x418xf32>
    %15 = math.exp %14 : vector<16x418xf32>
    %cst_12 = arith.constant 1.000000e+00 : f32
    %16 = vector.broadcast %cst_12 : f32 to vector<16x418xf32>
    %17 = arith.addf %16, %15 : vector<16x418xf32>
    %18 = arith.divf %16, %17 : vector<16x418xf32>
    %c0_13 = arith.constant 0 : index
    %c0_14 = arith.constant 0 : index
    %19 = vector.load %arg2[%c0_13, %c0_14] : memref<1x418xf32, #tpu.memory_space<vmem>>, vector<1x418xf32>
    %20 = vector.broadcast %19 : vector<1x418xf32> to vector<16x418xf32>
    %21 = arith.mulf %18, %20 : vector<16x418xf32>
    %c0_15 = arith.constant 0 : index
    %c0_16 = arith.constant 0 : index
    %22 = vector.load %arg12[%c0_15, %c0_16] : memref<16x418xf32, #tpu.memory_space<vmem>>, vector<16x418xf32>
    tpu.vector_store %arg12[%c0_15, %c0_16], %21 {strides = array<i32>} : memref<16x418xf32, #tpu.memory_space<vmem>>, vector<16x418xf32>,
    %c0_17 = arith.constant 0 : index
    %c0_18 = arith.constant 0 : index
    %23 = vector.load %arg12[%c0_17, %c0_18] : memref<16x418xf32, #tpu.memory_space<vmem>>, vector<16x361xf32>
    %c0_19 = arith.constant 0 : index
    %c0_20 = arith.constant 0 : index
    %24 = vector.load %arg13[%c0_19, %c0_20] : memref<144x361xf32, #tpu.memory_space<vmem>>, vector<16x361xf32>
    tpu.vector_store %arg13[%c0_19, %c0_20], %23 {strides = array<i32>} : memref<144x361xf32, #tpu.memory_space<vmem>>, vector<16x361xf32>,
    %c0_21 = arith.constant 0 : index
    %c1 = arith.constant 1 : index
    %25 = vector.load %arg12[%c0_21, %c1] : memref<16x418xf32, #tpu.memory_space<vmem>>, vector<16x361xf32>
    %c16 = arith.constant 16 : index
    %c0_22 = arith.constant 0 : index
    %26 = vector.load %arg13[%c16, %c0_22] : memref<144x361xf32, #tpu.memory_space<vmem>>, vector<16x361xf32>
    tpu.vector_store %arg13[%c16, %c0_22], %25 {strides = array<i32>} : memref<144x361xf32, #tpu.memory_space<vmem>>, vector<16x361xf32>,
    %c0_23 = arith.constant 0 : index
    %c2 = arith.constant 2 : index
    %27 = vector.load %arg12[%c0_23, %c2] : memref<16x418xf32, #tpu.memory_space<vmem>>, vector<16x361xf32>
    %c32 = arith.constant 32 : index
    %c0_24 = arith.constant 0 : index
    %28 = vector.load %arg13[%c32, %c0_24] : memref<144x361xf32, #tpu.memory_space<vmem>>, vector<16x361xf32>
    tpu.vector_store %arg13[%c32, %c0_24], %27 {strides = array<i32>} : memref<144x361xf32, #tpu.memory_space<vmem>>, vector<16x361xf32>,
    %c0_25 = arith.constant 0 : index
    %c19 = arith.constant 19 : index
    %29 = vector.load %arg12[%c0_25, %c19] : memref<16x418xf32, #tpu.memory_space<vmem>>, vector<16x361xf32>
    %c48 = arith.constant 48 : index
    %c0_26 = arith.constant 0 : index
    %30 = vector.load %arg13[%c48, %c0_26] : memref<144x361xf32, #tpu.memory_space<vmem>>, vector<16x361xf32>
    tpu.vector_store %arg13[%c48, %c0_26], %29 {strides = array<i32>} : memref<144x361xf32, #tpu.memory_space<vmem>>, vector<16x361xf32>,
    %c0_27 = arith.constant 0 : index
    %c20 = arith.constant 20 : index
    %31 = vector.load %arg12[%c0_27, %c20] : memref<16x418xf32, #tpu.memory_space<vmem>>, vector<16x361xf32>
    %c64 = arith.constant 64 : index
    %c0_28 = arith.constant 0 : index
    %32 = vector.load %arg13[%c64, %c0_28] : memref<144x361xf32, #tpu.memory_space<vmem>>, vector<16x361xf32>
    tpu.vector_store %arg13[%c64, %c0_28], %31 {strides = array<i32>} : memref<144x361xf32, #tpu.memory_space<vmem>>, vector<16x361xf32>,
    %c0_29 = arith.constant 0 : index
    %c21 = arith.constant 21 : index
    %33 = vector.load %arg12[%c0_29, %c21] : memref<16x418xf32, #tpu.memory_space<vmem>>, vector<16x361xf32>
    %c80 = arith.constant 80 : index
    %c0_30 = arith.constant 0 : index
    %34 = vector.load %arg13[%c80, %c0_30] : memref<144x361xf32, #tpu.memory_space<vmem>>, vector<16x361xf32>
    tpu.vector_store %arg13[%c80, %c0_30], %33 {strides = array<i32>} : memref<144x361xf32, #tpu.memory_space<vmem>>, vector<16x361xf32>,
    %c0_31 = arith.constant 0 : index
    %c38 = arith.constant 38 : index
    %35 = vector.load %arg12[%c0_31, %c38] : memref<16x418xf32, #tpu.memory_space<vmem>>, vector<16x361xf32>
    %c96 = arith.constant 96 : index
    %c0_32 = arith.constant 0 : index
    %36 = vector.load %arg13[%c96, %c0_32] : memref<144x361xf32, #tpu.memory_space<vmem>>, vector<16x361xf32>
    tpu.vector_store %arg13[%c96, %c0_32], %35 {strides = array<i32>} : memref<144x361xf32, #tpu.memory_space<vmem>>, vector<16x361xf32>,
    %c0_33 = arith.constant 0 : index
    %c39 = arith.constant 39 : index
    %37 = vector.load %arg12[%c0_33, %c39] : memref<16x418xf32, #tpu.memory_space<vmem>>, vector<16x361xf32>
    %c112 = arith.constant 112 : index
    %c0_34 = arith.constant 0 : index
    %38 = vector.load %arg13[%c112, %c0_34] : memref<144x361xf32, #tpu.memory_space<vmem>>, vector<16x361xf32>
    tpu.vector_store %arg13[%c112, %c0_34], %37 {strides = array<i32>} : memref<144x361xf32, #tpu.memory_space<vmem>>, vector<16x361xf32>,
    %c0_35 = arith.constant 0 : index
    %c40 = arith.constant 40 : index
    %39 = vector.load %arg12[%c0_35, %c40] : memref<16x418xf32, #tpu.memory_space<vmem>>, vector<16x361xf32>
    %c128 = arith.constant 128 : index
    %c0_36 = arith.constant 0 : index
    %40 = vector.load %arg13[%c128, %c0_36] : memref<144x361xf32, #tpu.memory_space<vmem>>, vector<16x361xf32>
    tpu.vector_store %arg13[%c128, %c0_36], %39 {strides = array<i32>} : memref<144x361xf32, #tpu.memory_space<vmem>>, vector<16x361xf32>,
    %c0_37 = arith.constant 0 : index
    %c0_38 = arith.constant 0 : index
    %41 = vector.load %arg7[%c0_37, %c0_38] : memref<32x144xf32, #tpu.memory_space<vmem>>, vector<32x144xf32>
    %c0_39 = arith.constant 0 : index
    %c0_40 = arith.constant 0 : index
    %42 = vector.load %arg13[%c0_39, %c0_40] : memref<144x361xf32, #tpu.memory_space<vmem>>, vector<144x361xf32>
    %cst_41 = arith.constant dense<0.000000e+00> : vector<32x361xf32>
    %43 = tpu.matmul %41, %42, %cst_41 {dimension_numbers = #tpu.dot_dimension_numbers<[1], [0], [0], [1], [0, 0, 1, 1], [], []>} : vector<32x144xf32>, vector<144x361xf32>, vector<32x361xf32> -> vector<32x361xf32>
    %c0_42 = arith.constant 0 : index
    %c0_43 = arith.constant 0 : index
    %44 = vector.load %arg8[%c0_42, %c0_43] : memref<32x1xf32, #tpu.memory_space<vmem>>, vector<32x1xf32>
    %45 = vector.broadcast %44 : vector<32x1xf32> to vector<32x361xf32>
    %46 = arith.addf %43, %45 : vector<32x361xf32>
    %47 = arith.negf %46 : vector<32x361xf32>
    %48 = math.exp %47 : vector<32x361xf32>
    %cst_44 = arith.constant 1.000000e+00 : f32
    %49 = vector.broadcast %cst_44 : f32 to vector<32x361xf32>
    %50 = arith.addf %49, %48 : vector<32x361xf32>
    %51 = arith.divf %49, %50 : vector<32x361xf32>
    %c0_45 = arith.constant 0 : index
    %c0_46 = arith.constant 0 : index
    %52 = vector.load %arg9[%c0_45, %c0_46] : memref<64x32xf32, #tpu.memory_space<vmem>>, vector<64x32xf32>
    %cst_47 = arith.constant dense<0.000000e+00> : vector<64x361xf32>
    %53 = tpu.matmul %52, %51, %cst_47 {dimension_numbers = #tpu.dot_dimension_numbers<[1], [0], [0], [1], [0, 0, 1, 1], [], []>} : vector<64x32xf32>, vector<32x361xf32>, vector<64x361xf32> -> vector<64x361xf32>
    %c0_48 = arith.constant 0 : index
    %c0_49 = arith.constant 0 : index
    %54 = vector.load %arg10[%c0_48, %c0_49] : memref<64x1xf32, #tpu.memory_space<vmem>>, vector<64x1xf32>
    %55 = vector.broadcast %54 : vector<64x1xf32> to vector<64x361xf32>
    %56 = arith.addf %53, %55 : vector<64x361xf32>
    %57 = arith.negf %56 : vector<64x361xf32>
    %58 = math.exp %57 : vector<64x361xf32>
    %cst_50 = arith.constant 1.000000e+00 : f32
    %59 = vector.broadcast %cst_50 : f32 to vector<64x361xf32>
    %60 = arith.addf %59, %58 : vector<64x361xf32>
    %61 = arith.divf %59, %60 : vector<64x361xf32>
    %c0_51 = arith.constant 0 : index
    %c0_52 = arith.constant 0 : index
    %c0_53 = arith.constant 0 : index
    %62 = vector.load %arg11[%c0_51, %c0_52, %c0_53] : memref<1x64x361xf32, #tpu.memory_space<vmem>>, vector<1x64x361xf32>
    %63 = vector.shape_cast %62 : vector<1x64x361xf32> to vector<64x361xf32>
    %64 = vector.shape_cast %61 : vector<64x361xf32> to vector<1x64x361xf32>
    tpu.vector_store %arg11[%c0_51, %c0_52, %c0_53], %64 {strides = array<i32>} : memref<1x64x361xf32, #tpu.memory_space<vmem>>, vector<1x64x361xf32>,
    return
  }
  func.func @transform_0(%arg0: i32) -> (i32, i32, i32) {
    %c0_i32 = arith.constant 0 : i32
    %c0_i32_0 = arith.constant 0 : i32
    %c0_i32_1 = arith.constant 0 : i32
    return %arg0, %c0_i32, %c0_i32_0 : i32, i32, i32
  }
  func.func @transform_1(%arg0: i32) -> (i32, i32) {
    %c0_i32 = arith.constant 0 : i32
    %c0_i32_0 = arith.constant 0 : i32
    %c0_i32_1 = arith.constant 0 : i32
    return %c0_i32, %c0_i32_0 : i32, i32
  }
  func.func @transform_2(%arg0: i32) -> (i32, i32) {
    %c0_i32 = arith.constant 0 : i32
    %c0_i32_0 = arith.constant 0 : i32
    %c0_i32_1 = arith.constant 0 : i32
    return %c0_i32, %c0_i32_0 : i32, i32
  }
  func.func @transform_3(%arg0: i32) -> (i32, i32) {
    %c0_i32 = arith.constant 0 : i32
    %c0_i32_0 = arith.constant 0 : i32
    %c0_i32_1 = arith.constant 0 : i32
    return %c0_i32, %c0_i32_0 : i32, i32
  }
  func.func @transform_4(%arg0: i32) -> (i32, i32) {
    %c0_i32 = arith.constant 0 : i32
    %c0_i32_0 = arith.constant 0 : i32
    %c0_i32_1 = arith.constant 0 : i32
    return %c0_i32, %c0_i32_0 : i32, i32
  }
  func.func @transform_5(%arg0: i32) -> (i32, i32) {
    %c0_i32 = arith.constant 0 : i32
    %c0_i32_0 = arith.constant 0 : i32
    %c0_i32_1 = arith.constant 0 : i32
    return %c0_i32, %c0_i32_0 : i32, i32
  }
  func.func @transform_6(%arg0: i32) -> (i32, i32) {
    %c0_i32 = arith.constant 0 : i32
    %c0_i32_0 = arith.constant 0 : i32
    %c0_i32_1 = arith.constant 0 : i32
    return %c0_i32, %c0_i32_0 : i32, i32
  }
  func.func @transform_7(%arg0: i32) -> (i32, i32) {
    %c0_i32 = arith.constant 0 : i32
    %c0_i32_0 = arith.constant 0 : i32
    %c0_i32_1 = arith.constant 0 : i32
    return %c0_i32, %c0_i32_0 : i32, i32
  }
  func.func @transform_8(%arg0: i32) -> (i32, i32) {
    %c0_i32 = arith.constant 0 : i32
    %c0_i32_0 = arith.constant 0 : i32
    %c0_i32_1 = arith.constant 0 : i32
    return %c0_i32, %c0_i32_0 : i32, i32
  }
  func.func @transform_9(%arg0: i32) -> (i32, i32) {
    %c0_i32 = arith.constant 0 : i32
    %c0_i32_0 = arith.constant 0 : i32
    %c0_i32_1 = arith.constant 0 : i32
    return %c0_i32, %c0_i32_0 : i32, i32
  }
  func.func @transform_10(%arg0: i32) -> (i32, i32, i32) {
    %c0_i32 = arith.constant 0 : i32
    %c0_i32_0 = arith.constant 0 : i32
    %c0_i32_1 = arith.constant 0 : i32
    return %arg0, %c0_i32, %c0_i32_0 : i32, i32, i32
  }
}

</mosaic_0001>

<llo_original>
// kernel: _forward_impl.1
$region0: #{_forward_impl.1}
  #allocation0 [shape = 'u32[]', space=smem, size = 0x4, offset = 0x4, fixed_abs, tag = 'smem constant byte address 0x4 - core index']
  #allocation1 [shape = 'u32[144,128]{1,0:T(1,128)}', space=vmem, size = 0x12000, scoped, tag = 'internal scratch']
  #allocation2 [shape = 'f32[16,418]{1,0:T(8,128)}', space=vmem, size = 0x8000, scoped, tag = 'scratch operand']
  #allocation3 [shape = 'f32[144,361]{1,0:T(8,128)}', space=vmem, size = 0x36000, scoped, tag = 'scratch operand']
  %s0 = inlined_call_operand.vmem [shape: f32[2,8,418], index: 0, kind: input, shape index: {}]
  %s1 = inlined_call_operand.vmem [shape: f32[1,418], index: 1, kind: input, shape index: {}]
  %s2 = inlined_call_operand.vmem [shape: f32[32,8], index: 2, kind: input, shape index: {}]
  %s3 = inlined_call_operand.vmem [shape: f32[32,1], index: 3, kind: input, shape index: {}]
  %s4 = inlined_call_operand.hbm [shape: f32[16,32], index: 4, kind: input, shape index: {}]
  %s5 = inlined_call_operand.vmem [shape: f32[16,1], index: 5, kind: input, shape index: {}]
  %s6 = inlined_call_operand.hbm [shape: f32[32,144], index: 6, kind: input, shape index: {}]
  %s7 = inlined_call_operand.vmem [shape: f32[32,1], index: 7, kind: input, shape index: {}]
  %s8 = inlined_call_operand.vmem [shape: f32[64,32], index: 8, kind: input, shape index: {}]
  %s9 = inlined_call_operand.vmem [shape: f32[64,1], index: 9, kind: input, shape index: {}]
  %s10 = inlined_call_operand.vmem [shape: f32[2,64,361], index: 10, kind: output, shape index: {}]
  %s11 = sld [smem:[#allocation0]]
  $region81: #{_forward_impl.1} parent=0
    _
  %s13 = ssub.s32 1, %s11
  %s14 = scalar_select 0, %s13, %s11
  $region1: #{_forward_impl.1} parent=0
    #allocation4 [shape = 'u8[8192]{0}', space=vmem, size = 0x2000, scoped, tag = 'input window, operand 4, single buffered']
    #allocation5 [shape = 's32[2]{0}', space=sflag, size = 0x8, scoped, tag = 'scoped memory for _forward_impl.1']
    #allocation6 [shape = 'u8[32768]{0}', space=vmem, size = 0x8000, scoped, tag = 'input window, operand 6, single buffered']
    #allocation7 [shape = 's32[1]{0}', space=sflag, size = 0x4, scoped, tag = 'scoped memory for _forward_impl.1']
    %15 = vsyncpa [#allocation5], 0
    %16 = vsyncpa [#allocation7], 0
    loop: start=0, step=1, limit=4
    $region2: #{_forward_impl.1} parent=1 // loop_pre_header
      _
    $region3: #{_forward_impl.1} parent=1 // loop_header
      %s18 = sphi 0, %s22
      %p19 = scmp.ge.s32.totalorder %s18, 4
      %s28 = sphi 0, %s30
      %s31 = sphi 0, %s28
      %s32 = sphi 0, %s31
      %s48 = sphi 0, %s32
      %s52 = sphi 0, %s52
      %s54 = sphi 0, %s52
      %s55 = sphi 0, %s54
      %s69 = sphi 0, %s55
      %s73 = sphi 0, %s73
      %s75 = sphi 0, %s73
      %s76 = sphi 0, %s75
      %s90 = sphi 0, %s76
      %s94 = sphi 0, %s94
      %s96 = sphi 0, %s94
      %s97 = sphi 0, %s96
      %s111 = sphi 0, %s97
      %s115 = sphi 0, %s115
      %s117 = sphi 0, %s115
      %s118 = sphi 0, %s117
      %s132 = sphi 0, %s118
      %s136 = sphi 0, %s136
      %s138 = sphi 0, %s136
      %s139 = sphi 0, %s138
      %s153 = sphi 0, %s139
      %s157 = sphi 0, %s157
      %s159 = sphi 0, %s157
      %s160 = sphi 0, %s159
      %s174 = sphi 0, %s160
      %s178 = sphi 0, %s178
      %s180 = sphi 0, %s178
      %s181 = sphi 0, %s180
      %s195 = sphi 0, %s181
      %s199 = sphi 0, %s199
      %s201 = sphi 0, %s199
      %s202 = sphi 0, %s201
      %s216 = sphi 0, %s202
      %s220 = sphi 0, %s220
      %s222 = sphi 0, %s220
      %s223 = sphi 0, %s222
      %s237 = sphi 0, %s223
      %s243 = sphi 0, %s245
      %s246 = sphi 0, %s243
      %s247 = sphi 0, %s246
      %s263 = sphi 0, %s247
    $region4: #{_forward_impl.1} parent=1 // loop_header_branch
      %21 = sbr.rel (%p19) target = $region8
    $region5: #{_forward_impl.1} parent=1 // loop_body
      %s23 = ssub.s32 %s18, 1
      %s24 = ssub.s32 %s18, 2
      %s25 = sadd.s32 %s18, 1
      %s26 = ssub.s32 %s18, %s25
      %p27 = scmp.eq.s32.totalorder %s26, 0
      %s29 = sadd.s32 %s28, 1
      %s30 = scalar_select %p27, %s28, %s29
      %p33 = pneg %p27
      %p34 = scmp.eq.s32.totalorder %s18, 1
      %p35 = por %p33, %p34
      %p36 = scmp.ne.s32.totalorder %s28, %s31
      %p37 = scmp.eq.s32.totalorder %s18, 0
      %p38 = por %p36, %p37
      %p39 = scmp.ne.s32.totalorder %s28, %s31
      %p40 = scmp.eq.s32.totalorder %s23, 1
      %p41 = por %p39, %p40
      %p42 = scmp.ne.s32.totalorder %s31, %s32
      %p43 = scmp.eq.s32.totalorder %s23, 0
      %p44 = por %p42, %p43
      %p45 = scmp.ne.s32.totalorder %s31, %s32
      %p46 = scmp.eq.s32.totalorder %s24, 1
      %p47 = por %p45, %p46
      %p49 = scmp.ne.s32.totalorder %s32, %s48
      %p50 = scmp.eq.s32.totalorder %s24, 0
      %p51 = por %p49, %p50
      %s53 = sadd.s32 %s52, 1
      %p56 = scmp.eq.s32.totalorder %s18, 1
      %p57 = scmp.ne.s32.totalorder %s52, %s54
      %p58 = scmp.eq.s32.totalorder %s18, 0
      %p59 = por %p57, %p58
      %p60 = scmp.ne.s32.totalorder %s52, %s54
      %p61 = scmp.eq.s32.totalorder %s23, 1
      %p62 = por %p60, %p61
      %p63 = scmp.ne.s32.totalorder %s54, %s55
      %p64 = scmp.eq.s32.totalorder %s23, 0
      %p65 = por %p63, %p64
      %p66 = scmp.ne.s32.totalorder %s54, %s55
      %p67 = scmp.eq.s32.totalorder %s24, 1
      %p68 = por %p66, %p67
      %p70 = scmp.ne.s32.totalorder %s55, %s69
      %p71 = scmp.eq.s32.totalorder %s24, 0
      %p72 = por %p70, %p71
      %s74 = sadd.s32 %s73, 1
      %p77 = scmp.eq.s32.totalorder %s18, 1
      %p78 = scmp.ne.s32.totalorder %s73, %s75
      %p79 = scmp.eq.s32.totalorder %s18, 0
      %p80 = por %p78, %p79
      %p81 = scmp.ne.s32.totalorder %s73, %s75
      %p82 = scmp.eq.s32.totalorder %s23, 1
      %p83 = por %p81, %p82
      %p84 = scmp.ne.s32.totalorder %s75, %s76
      %p85 = scmp.eq.s32.totalorder %s23, 0
      %p86 = por %p84, %p85
      %p87 = scmp.ne.s32.totalorder %s75, %s76
      %p88 = scmp.eq.s32.totalorder %s24, 1
      %p89 = por %p87, %p88
      %p91 = scmp.ne.s32.totalorder %s76, %s90
      %p92 = scmp.eq.s32.totalorder %s24, 0
      %p93 = por %p91, %p92
      %s95 = sadd.s32 %s94, 1
      %p98 = scmp.eq.s32.totalorder %s18, 1
      %p99 = scmp.ne.s32.totalorder %s94, %s96
      %p100 = scmp.eq.s32.totalorder %s18, 0
      %p101 = por %p99, %p100
      %p102 = scmp.ne.s32.totalorder %s94, %s96
      %p103 = scmp.eq.s32.totalorder %s23, 1
      %p104 = por %p102, %p103
      %p105 = scmp.ne.s32.totalorder %s96, %s97
      %p106 = scmp.eq.s32.totalorder %s23, 0
      %p107 = por %p105, %p106
      %p108 = scmp.ne.s32.totalorder %s96, %s97
      %p109 = scmp.eq.s32.totalorder %s24, 1
      %p110 = por %p108, %p109
      %p112 = scmp.ne.s32.totalorder %s97, %s111
      %p113 = scmp.eq.s32.totalorder %s24, 0
      %p114 = por %p112, %p113
      %s116 = sadd.s32 %s115, 1
      %p119 = scmp.eq.s32.totalorder %s18, 1
      %p120 = scmp.ne.s32.totalorder %s115, %s117
      %p121 = scmp.eq.s32.totalorder %s18, 0
      %p122 = por %p120, %p121
      %p123 = scmp.ne.s32.totalorder %s115, %s117
      %p124 = scmp.eq.s32.totalorder %s23, 1
      %p125 = por %p123, %p124
      %p126 = scmp.ne.s32.totalorder %s117, %s118
      %p127 = scmp.eq.s32.totalorder %s23, 0
      %p128 = por %p126, %p127
      %p129 = scmp.ne.s32.totalorder %s117, %s118
      %p130 = scmp.eq.s32.totalorder %s24, 1
      %p131 = por %p129, %p130
      %p133 = scmp.ne.s32.totalorder %s118, %s132
      %p134 = scmp.eq.s32.totalorder %s24, 0
      %p135 = por %p133, %p134
      %s137 = sadd.s32 %s136, 1
      %p140 = scmp.eq.s32.totalorder %s18, 1
      %p141 = scmp.ne.s32.totalorder %s136, %s138
      %p142 = scmp.eq.s32.totalorder %s18, 0
      %p143 = por %p141, %p142
      %p144 = scmp.ne.s32.totalorder %s136, %s138
      %p145 = scmp.eq.s32.totalorder %s23, 1
      %p146 = por %p144, %p145
      %p147 = scmp.ne.s32.totalorder %s138, %s139
      %p148 = scmp.eq.s32.totalorder %s23, 0
      %p149 = por %p147, %p148
      %p150 = scmp.ne.s32.totalorder %s138, %s139
      %p151 = scmp.eq.s32.totalorder %s24, 1
      %p152 = por %p150, %p151
      %p154 = scmp.ne.s32.totalorder %s139, %s153
      %p155 = scmp.eq.s32.totalorder %s24, 0
      %p156 = por %p154, %p155
      %s158 = sadd.s32 %s157, 1
      %p161 = scmp.eq.s32.totalorder %s18, 1
      %p162 = scmp.ne.s32.totalorder %s157, %s159
      %p163 = scmp.eq.s32.totalorder %s18, 0
      %p164 = por %p162, %p163
      %p165 = scmp.ne.s32.totalorder %s157, %s159
      %p166 = scmp.eq.s32.totalorder %s23, 1
      %p167 = por %p165, %p166
      %p168 = scmp.ne.s32.totalorder %s159, %s160
      %p169 = scmp.eq.s32.totalorder %s23, 0
      %p170 = por %p168, %p169
      %p171 = scmp.ne.s32.totalorder %s159, %s160
      %p172 = scmp.eq.s32.totalorder %s24, 1
      %p173 = por %p171, %p172
      %p175 = scmp.ne.s32.totalorder %s160, %s174
      %p176 = scmp.eq.s32.totalorder %s24, 0
      %p177 = por %p175, %p176
      %s179 = sadd.s32 %s178, 1
      %p182 = scmp.eq.s32.totalorder %s18, 1
      %p183 = scmp.ne.s32.totalorder %s178, %s180
      %p184 = scmp.eq.s32.totalorder %s18, 0
      %p185 = por %p183, %p184
      %p186 = scmp.ne.s32.totalorder %s178, %s180
      %p187 = scmp.eq.s32.totalorder %s23, 1
      %p188 = por %p186, %p187
      %p189 = scmp.ne.s32.totalorder %s180, %s181
      %p190 = scmp.eq.s32.totalorder %s23, 0
      %p191 = por %p189, %p190
      %p192 = scmp.ne.s32.totalorder %s180, %s181
      %p193 = scmp.eq.s32.totalorder %s24, 1
      %p194 = por %p192, %p193
      %p196 = scmp.ne.s32.totalorder %s181, %s195
      %p197 = scmp.eq.s32.totalorder %s24, 0
      %p198 = por %p196, %p197
      %s200 = sadd.s32 %s199, 1
      %p203 = scmp.eq.s32.totalorder %s18, 1
      %p204 = scmp.ne.s32.totalorder %s199, %s201
      %p205 = scmp.eq.s32.totalorder %s18, 0
      %p206 = por %p204, %p205
      %p207 = scmp.ne.s32.totalorder %s199, %s201
      %p208 = scmp.eq.s32.totalorder %s23, 1
      %p209 = por %p207, %p208
      %p210 = scmp.ne.s32.totalorder %s201, %s202
      %p211 = scmp.eq.s32.totalorder %s23, 0
      %p212 = por %p210, %p211
      %p213 = scmp.ne.s32.totalorder %s201, %s202
      %p214 = scmp.eq.s32.totalorder %s24, 1
      %p215 = por %p213, %p214
      %p217 = scmp.ne.s32.totalorder %s202, %s216
      %p218 = scmp.eq.s32.totalorder %s24, 0
      %p219 = por %p217, %p218
      %s221 = sadd.s32 %s220, 1
      %p224 = scmp.eq.s32.totalorder %s18, 1
      %p225 = scmp.ne.s32.totalorder %s220, %s222
      %p226 = scmp.eq.s32.totalorder %s18, 0
      %p227 = por %p225, %p226
      %p228 = scmp.ne.s32.totalorder %s220, %s222
      %p229 = scmp.eq.s32.totalorder %s23, 1
      %p230 = por %p228, %p229
      %p231 = scmp.ne.s32.totalorder %s222, %s223
      %p232 = scmp.eq.s32.totalorder %s23, 0
      %p233 = por %p231, %p232
      %p234 = scmp.ne.s32.totalorder %s222, %s223
      %p235 = scmp.eq.s32.totalorder %s24, 1
      %p236 = por %p234, %p235
      %p238 = scmp.ne.s32.totalorder %s223, %s237
      %p239 = scmp.eq.s32.totalorder %s24, 0
      %p240 = por %p238, %p239
      %s241 = ssub.s32 %s18, %s25
      %p242 = scmp.eq.s32.totalorder %s241, 0
      %s244 = sadd.s32 %s243, 1
      %s245 = scalar_select %p242, %s243, %s244
      %p248 = pneg %p242
      %p249 = scmp.eq.s32.totalorder %s18, 1
      %p250 = por %p248, %p249
      %p251 = scmp.ne.s32.totalorder %s243, %s246
      %p252 = scmp.eq.s32.totalorder %s18, 0
      %p253 = por %p251, %p252
      %p254 = scmp.ne.s32.totalorder %s243, %s246
      %p255 = scmp.eq.s32.totalorder %s23, 1
      %p256 = por %p254, %p255
      %p257 = scmp.ne.s32.totalorder %s246, %s247
      %p258 = scmp.eq.s32.totalorder %s23, 0
      %p259 = por %p257, %p258
      %p260 = scmp.ne.s32.totalorder %s246, %s247
      %p261 = scmp.eq.s32.totalorder %s24, 1
      %p262 = por %p260, %p261
      %p264 = scmp.ne.s32.totalorder %s247, %s263
      %p265 = scmp.eq.s32.totalorder %s24, 0
      %p266 = por %p264, %p265
      %p267 = scmp.le.s32.totalorder 1, %s18
      %p268 = scmp.lt.s32.totalorder %s18, 3
      %p269 = pnand %p267, %p268
      %p270 = pneg %p269
      // Predicated region
      $region9: #{_forward_impl.1} parent=5 // pred_check
        _
      $region10: #{_forward_impl.1} parent=5 // pred_check_branch
        %272 = sbr.rel (%p269) target = $region12
      $region11: #{_forward_impl.1} parent=5 // pred_region
        %s273 = ssub.s32 %s18, 1
        // Predicated region
        $region13: #{_forward_impl.1} parent=11 // pred_check
          %p274 = pneg %p65
        $region14: #{_forward_impl.1} parent=11 // pred_check_branch
          %276 = sbr.rel (%p274) target = $region16
        $region15: #{_forward_impl.1} parent=11 // pred_region
          _
        $region16: #{_forward_impl.1} parent=11 // pred_fallthru
          _
        // Predicated region
        $region17: #{_forward_impl.1} parent=11 // pred_check
          %p277 = pneg %p86
        $region18: #{_forward_impl.1} parent=11 // pred_check_branch
          %279 = sbr.rel (%p277) target = $region20
        $region19: #{_forward_impl.1} parent=11 // pred_region
          _
        $region20: #{_forward_impl.1} parent=11 // pred_fallthru
          _
        // Predicated region
        $region21: #{_forward_impl.1} parent=11 // pred_check
          %p280 = pneg %p107
        $region22: #{_forward_impl.1} parent=11 // pred_check_branch
          %282 = sbr.rel (%p280) target = $region24
        $region23: #{_forward_impl.1} parent=11 // pred_region
          _
        $region24: #{_forward_impl.1} parent=11 // pred_fallthru
          _
        // Predicated region
        $region25: #{_forward_impl.1} parent=11 // pred_check
          %p283 = pneg %p128
        $region26: #{_forward_impl.1} parent=11 // pred_check_branch
          %285 = sbr.rel (%p283) target = $region28
        $region27: #{_forward_impl.1} parent=11 // pred_region
          %s287 = ssub.s32 256, 256
          %288 = vsyncadd [#allocation5], %s287
          %s289 = sshll.u32 [#allocation4], 4
          %s290 = int_to_ptr.vmem [resolvable:$true] %s289
          %295 = dma.hbm_to_vmem [thread:$0]  %s4, 256, %s290, [#allocation5], 128, 128, 8
        $region28: #{_forward_impl.1} parent=11 // pred_fallthru
          _
        // Predicated region
        $region29: #{_forward_impl.1} parent=11 // pred_check
          %p296 = pneg %p149
        $region30: #{_forward_impl.1} parent=11 // pred_check_branch
          %298 = sbr.rel (%p296) target = $region32
        $region31: #{_forward_impl.1} parent=11 // pred_region
          _
        $region32: #{_forward_impl.1} parent=11 // pred_fallthru
          _
        // Predicated region
        $region33: #{_forward_impl.1} parent=11 // pred_check
          %p299 = pneg %p170
        $region34: #{_forward_impl.1} parent=11 // pred_check_branch
          %301 = sbr.rel (%p299) target = $region36
        $region35: #{_forward_impl.1} parent=11 // pred_region
          %s303 = ssub.s32 1024, 1024
          %304 = vsyncadd [#allocation7], %s303
          %s305 = sshll.u32 [#allocation6], 4
          %s306 = int_to_ptr.vmem [resolvable:$true] %s305
          %311 = dma.hbm_to_vmem [thread:$0]  %s6, 1024, %s306, [#allocation7], 256, 256, 16
        $region36: #{_forward_impl.1} parent=11 // pred_fallthru
          _
        // Predicated region
        $region37: #{_forward_impl.1} parent=11 // pred_check
          %p312 = pneg %p191
        $region38: #{_forward_impl.1} parent=11 // pred_check_branch
          %314 = sbr.rel (%p312) target = $region40
        $region39: #{_forward_impl.1} parent=11 // pred_region
          _
        $region40: #{_forward_impl.1} parent=11 // pred_fallthru
          _
        // Predicated region
        $region41: #{_forward_impl.1} parent=11 // pred_check
          %p315 = pneg %p212
        $region42: #{_forward_impl.1} parent=11 // pred_check_branch
          %317 = sbr.rel (%p315) target = $region44
        $region43: #{_forward_impl.1} parent=11 // pred_region
          _
        $region44: #{_forward_impl.1} parent=11 // pred_fallthru
          _
        // Predicated region
        $region45: #{_forward_impl.1} parent=11 // pred_check
          %p318 = pneg %p233
        $region46: #{_forward_impl.1} parent=11 // pred_check_branch
          %320 = sbr.rel (%p318) target = $region48
        $region47: #{_forward_impl.1} parent=11 // pred_region
          _
        $region48: #{_forward_impl.1} parent=11 // pred_fallthru
          _
      $region12: #{_forward_impl.1} parent=5 // pred_fallthru
        _
      %p321 = scmp.lt.s32.totalorder %s18, 2
      // Predicated region
      $region49: #{_forward_impl.1} parent=5 // pred_check
        %p322 = pneg %p321
      $region50: #{_forward_impl.1} parent=5 // pred_check_branch
        %324 = sbr.rel (%p322) target = $region52
      $region51: #{_forward_impl.1} parent=5 // pred_region
        // Predicated region
        $region53: #{_forward_impl.1} parent=51 // pred_check
          %p325 = pneg %p38
        $region54: #{_forward_impl.1} parent=51 // pred_check_branch
          %327 = sbr.rel (%p325) target = $region56
        $region55: #{_forward_impl.1} parent=51 // pred_region
          %p328 = scmp.lt.s32.totalorder %s18, 1
          %s329 = scalar_select %p328, %s18, 1
          %s330 = smul.addr %s329, 4
          %s331 = smul.addr %s330, 8
          %s332 = scalar_lea.vmem %s0, %s331
        $region56: #{_forward_impl.1} parent=51 // pred_fallthru
          _
      $region52: #{_forward_impl.1} parent=5 // pred_fallthru
        _
      %p333 = scmp.le.s32.totalorder 1, %s18
      %p334 = scmp.lt.s32.totalorder %s18, 3
      %p335 = pnand %p333, %p334
      %p336 = pneg %p335
      // Predicated region
      $region57: #{_forward_impl.1} parent=5 // pred_check
        _
      $region58: #{_forward_impl.1} parent=5 // pred_check_branch
        %338 = sbr.rel (%p335) target = $region60
      $region59: #{_forward_impl.1} parent=5 // pred_region
        %s339 = ssub.s32 %s18, 1
        // Predicated region
        $region61: #{_forward_impl.1} parent=59 // pred_check
          %p340 = pneg %p128
        $region62: #{_forward_impl.1} parent=59 // pred_check_branch
          %342 = sbr.rel (%p340) target = $region64
        $region63: #{_forward_impl.1} parent=59 // pred_region
          %343 = dma.done [#allocation5], 256
        $region64: #{_forward_impl.1} parent=59 // pred_fallthru
          _
        // Predicated region
        $region65: #{_forward_impl.1} parent=59 // pred_check
          %p344 = pneg %p170
        $region66: #{_forward_impl.1} parent=59 // pred_check_branch
          %346 = sbr.rel (%p344) target = $region68
        $region67: #{_forward_impl.1} parent=59 // pred_region
          %347 = dma.done [#allocation7], 1024
        $region68: #{_forward_impl.1} parent=59 // pred_fallthru
          _
        %p348 = scmp.lt.s32.totalorder %s23, 1
        %s349 = scalar_select %p348, %s23, 1
        %s350 = smul.addr %s349, 4
        %s351 = smul.addr %s350, 8
        %s352 = scalar_lea.vmem %s0, %s351
        %p353 = pneg %p44
        %p354 = pneg %p41
        %p355 = pneg %p65
        %p356 = pneg %p62
        %p357 = pneg %p86
        %p358 = pneg %p83
        %p359 = pneg %p107
        %p360 = pneg %p104
        %p361 = pneg %p128
        %p362 = pneg %p125
        %p363 = pneg %p149
        %p364 = pneg %p146
        %p365 = pneg %p170
        %p366 = pneg %p167
        %p367 = pneg %p191
        %p368 = pneg %p188
        %p369 = pneg %p212
        %p370 = pneg %p209
        %p371 = pneg %p233
        %p372 = pneg %p230
        %p373 = pneg %p259
        %p374 = pneg %p256
        %p375 = scmp.lt.s32.totalorder %s23, 1
        %s376 = scalar_select %p375, %s23, 1
        %s377 = smul.addr %s376, 24
        %s378 = smul.addr %s377, 8
        %s379 = scalar_lea.vmem %s10, %s378
        %p380 = scmp.lt.s32.totalorder %s23, 1
        %s381 = scalar_select %p380, %s23, 1
        %s382 = smul.addr %s381, 4
        %s383 = smul.addr %s382, 8
        %s384 = scalar_lea.vmem %s0, %s383
        %p385 = scmp.lt.s32.totalorder %s23, 1
        %s386 = scalar_select %p385, %s23, 1
        %s387 = smul.addr %s386, 24
        %s388 = smul.addr %s387, 8
        %s389 = scalar_lea.vmem %s10, %s388
        %v390 = vld [vmem:[%s384] sm:$0xff]
        %v391 = vld [vmem:[%s384 + $0x8] sm:$0xff]
        %v392 = vld [vmem:[%s384 + $0x10] sm:$0xff]
        %v393 = vld [vmem:[%s384 + $0x18] sm:$0xff]
        %v394 = vld [vmem:[%s2] sm:$0xff]
        %v395 = vld [vmem:[%s2 + $0x8] sm:$0xff]
        %v396 = vld [vmem:[%s2 + $0x10] sm:$0xff]
        %v397 = vld [vmem:[%s2 + $0x18] sm:$0xff]
        %v398 = vld [vmem:[%s3] sm:$0xff]
        %v399 = vld [vmem:[%s3 + $0x8] sm:$0xff]
        %v400 = vld [vmem:[%s3 + $0x10] sm:$0xff]
        %v401 = vld [vmem:[%s3 + $0x18] sm:$0xff]
        %403 = vset.pattern.permute.xlu0 0
        %404 = vperm.xlu0 %403, %v398
        %v405 = vpop.permute.xlu0 %404
        %408 = vset.pattern.permute.xlu0 0
        %409 = vperm.xlu0 %408, %v399
        %v410 = vpop.permute.xlu0 %409
        %413 = vset.pattern.permute.xlu0 0
        %414 = vperm.xlu0 %413, %v400
        %v415 = vpop.permute.xlu0 %414
        %418 = vset.pattern.permute.xlu0 0
        %419 = vperm.xlu0 %418, %v401
        %v420 = vpop.permute.xlu0 %419
        %vm422 = vcmask 64512
        %v424 = vsel %vm422, %v394, 0
        %v427 = vsel %vm422, %v395, 0
        %v430 = vsel %vm422, %v396, 0
        %v433 = vsel %vm422, %v397, 0
        %435 = vmatprep.subr.mxu0 %v391
        %436 = vmatpush1.msra.mxu0 %v390
        %437 = vmatprep.subr.mxu0 0.0
        %438 = vmatpush1.msra.mxu0 0.0
        %439 = vmatprep.subr.mxu0 0.0
        %440 = vmatpush1.msra.mxu0 0.0
        %441 = vmatprep.subr.mxu0 0.0
        %442 = vmatpush1.msra.mxu0 0.0
        %443 = vmatprep.subr.mxu0 0.0
        %444 = vmatpush1.msra.mxu0 0.0
        %445 = vmatprep.subr.mxu0 0.0
        %446 = vmatpush1.msra.mxu0 0.0
        %447 = vmatprep.subr.mxu0 0.0
        %448 = vmatpush1.msra.mxu0 0.0
        %449 = vmatprep.subr.mxu0 0.0
        %450 = vmatpush1.msra.mxu0 0.0
        %451 = vmatprep.subr.mxu0 0.0
        %452 = vmatpush1.msra.mxu0 0.0
        %453 = vmatprep.subr.mxu0 0.0
        %454 = vmatpush1.msra.mxu0 0.0
        %455 = vmatprep.subr.mxu0 0.0
        %456 = vmatpush1.msra.mxu0 0.0
        %457 = vmatprep.subr.mxu0 0.0
        %458 = vmatpush1.msra.mxu0 0.0
        %459 = vmatprep.subr.mxu0 0.0
        %460 = vmatpush1.msra.mxu0 0.0
        %461 = vmatprep.subr.mxu0 0.0
        %462 = vmatpush1.msra.mxu0 0.0
        %463 = vmatprep.subr.mxu0 0.0
        %464 = vmatpush1.msra.mxu0 0.0
        %465 = vmatprep.subr.mxu0 0.0
        %466 = vmatpush1.msra.mxu0 0.0
        %467 = vmatprep.subr.mxu0 0.0
        %468 = vmatpush1.msra.mxu0 0.0
        %469 = vmatprep.subr.mxu0 0.0
        %470 = vmatpush1.msra.mxu0 0.0
        %471 = vmatprep.subr.mxu0 0.0
        %472 = vmatpush1.msra.mxu0 0.0
        %473 = vmatprep.subr.mxu0 0.0
        %474 = vmatpush1.msra.mxu0 0.0
        %475 = vmatprep.subr.mxu0 0.0
        %476 = vmatpush1.msra.mxu0 0.0
        %477 = vmatprep.subr.mxu0 0.0
        %478 = vmatpush1.msra.mxu0 0.0
        %479 = vmatprep.subr.mxu0 0.0
        %480 = vmatpush1.msra.mxu0 0.0
        %481 = vmatprep.subr.mxu0 0.0
        %482 = vmatpush1.msra.mxu0 0.0
        %483 = vmatprep.subr.mxu0 0.0
        %484 = vmatpush1.msra.mxu0 0.0
        %485 = vmatprep.subr.mxu0 0.0
        %486 = vmatpush1.msra.mxu0 0.0
        %487 = vmatprep.subr.mxu0 0.0
        %488 = vmatpush1.msra.mxu0 0.0
        %489 = vmatprep.subr.mxu0 0.0
        %490 = vmatpush1.msra.mxu0 0.0
        %491 = vmatprep.subr.mxu0 0.0
        %492 = vmatpush1.msra.mxu0 0.0
        %493 = vmatprep.subr.mxu0 0.0
        %494 = vmatpush1.msra.mxu0 0.0
        %495 = vmatprep.subr.mxu0 0.0
        %496 = vmatpush1.msra.mxu0 0.0
        %497 = vmatprep.subr.mxu0 0.0
        %498 = vmatpush1.msra.mxu0 0.0
        %499 = vmatprep.mubr.f32.mxu0 0.0
        %500 = vmatmul.mubr.f32.gmra.mrb[0].mxu0 %v424
        %v501 = vpop.f32.mrb[0].mxu0
        %v502 = vadd.f32 %v405, %v501
        %v503 = vpop.f32.mrb[0].mxu0
        %v504 = vadd.f32 %v405, %v503
        %505 = vmatprep.mubr.f32.mxu0 0.0
        %506 = vmatmul.mubr.f32.gmra.mrb[0].mxu0 %v427
        %v507 = vpop.f32.mrb[0].mxu0
        %v508 = vadd.f32 %v410, %v507
        %v509 = vpop.f32.mrb[0].mxu0
        %v510 = vadd.f32 %v410, %v509
        %511 = vmatprep.mubr.f32.mxu0 0.0
        %512 = vmatmul.mubr.f32.gmra.mrb[0].mxu0 %v430
        %v513 = vpop.f32.mrb[0].mxu0
        %v514 = vadd.f32 %v415, %v513
        %v515 = vpop.f32.mrb[0].mxu0
        %v516 = vadd.f32 %v415, %v515
        %517 = vmatprep.mubr.f32.mxu0 0.0
        %518 = vmatmul.mubr.f32.gmra.mrb[0].mxu0 %v433
        %v519 = vpop.f32.mrb[0].mxu0
        %v520 = vadd.f32 %v420, %v519
        %v521 = vpop.f32.mrb[0].mxu0
        %v522 = vadd.f32 %v420, %v521
        %523 = vdwg.mxu0
        %524 = vmatprep.subr.mxu0 %v393
        %525 = vmatpush1.msra.mxu0 %v392
        %526 = vmatprep.subr.mxu0 0.0
        %527 = vmatpush1.msra.mxu0 0.0
        %528 = vmatprep.subr.mxu0 0.0
        %529 = vmatpush1.msra.mxu0 0.0
        %530 = vmatprep.subr.mxu0 0.0
        %531 = vmatpush1.msra.mxu0 0.0
        %532 = vmatprep.subr.mxu0 0.0
        %533 = vmatpush1.msra.mxu0 0.0
        %534 = vmatprep.subr.mxu0 0.0
        %535 = vmatpush1.msra.mxu0 0.0
        %536 = vmatprep.subr.mxu0 0.0
        %537 = vmatpush1.msra.mxu0 0.0
        %538 = vmatprep.subr.mxu0 0.0
        %539 = vmatpush1.msra.mxu0 0.0
        %540 = vmatprep.subr.mxu0 0.0
        %541 = vmatpush1.msra.mxu0 0.0
        %542 = vmatprep.subr.mxu0 0.0
        %543 = vmatpush1.msra.mxu0 0.0
        %544 = vmatprep.subr.mxu0 0.0
        %545 = vmatpush1.msra.mxu0 0.0
        %546 = vmatprep.subr.mxu0 0.0
        %547 = vmatpush1.msra.mxu0 0.0
        %548 = vmatprep.subr.mxu0 0.0
        %549 = vmatpush1.msra.mxu0 0.0
        %550 = vmatprep.subr.mxu0 0.0
        %551 = vmatpush1.msra.mxu0 0.0
        %552 = vmatprep.subr.mxu0 0.0
        %553 = vmatpush1.msra.mxu0 0.0
        %554 = vmatprep.subr.mxu0 0.0
        %555 = vmatpush1.msra.mxu0 0.0
        %556 = vmatprep.subr.mxu0 0.0
        %557 = vmatpush1.msra.mxu0 0.0
        %558 = vmatprep.subr.mxu0 0.0
        %559 = vmatpush1.msra.mxu0 0.0
        %560 = vmatprep.subr.mxu0 0.0
        %561 = vmatpush1.msra.mxu0 0.0
        %562 = vmatprep.subr.mxu0 0.0
        %563 = vmatpush1.msra.mxu0 0.0
        %564 = vmatprep.subr.mxu0 0.0
        %565 = vmatpush1.msra.mxu0 0.0
        %566 = vmatprep.subr.mxu0 0.0
        %567 = vmatpush1.msra.mxu0 0.0
        %568 = vmatprep.subr.mxu0 0.0
        %569 = vmatpush1.msra.mxu0 0.0
        %570 = vmatprep.subr.mxu0 0.0
        %571 = vmatpush1.msra.mxu0 0.0
        %572 = vmatprep.subr.mxu0 0.0
        %573 = vmatpush1.msra.mxu0 0.0
        %574 = vmatprep.subr.mxu0 0.0
        %575 = vmatpush1.msra.mxu0 0.0
        %576 = vmatprep.subr.mxu0 0.0
        %577 = vmatpush1.msra.mxu0 0.0
        %578 = vmatprep.subr.mxu0 0.0
        %579 = vmatpush1.msra.mxu0 0.0
        %580 = vmatprep.subr.mxu0 0.0
        %581 = vmatpush1.msra.mxu0 0.0
        %582 = vmatprep.subr.mxu0 0.0
        %583 = vmatpush1.msra.mxu0 0.0
        %584 = vmatprep.subr.mxu0 0.0
        %585 = vmatpush1.msra.mxu0 0.0
        %586 = vmatprep.subr.mxu0 0.0
        %587 = vmatpush1.msra.mxu0 0.0
        %588 = vmatprep.mubr.f32.mxu0 0.0
        %589 = vmatmul.mubr.f32.gmra.mrb[0].mxu0 %v424
        %v590 = vpop.f32.mrb[0].mxu0
        %v591 = vadd.f32 %v405, %v590
        %v592 = vpop.f32.mrb[0].mxu0
        %v593 = vadd.f32 %v405, %v592
        %594 = vmatprep.mubr.f32.mxu0 0.0
        %595 = vmatmul.mubr.f32.gmra.mrb[0].mxu0 %v427
        %v596 = vpop.f32.mrb[0].mxu0
        %v597 = vadd.f32 %v410, %v596
        %v598 = vpop.f32.mrb[0].mxu0
        %v599 = vadd.f32 %v410, %v598
        %600 = vmatprep.mubr.f32.mxu0 0.0
        %601 = vmatmul.mubr.f32.gmra.mrb[0].mxu0 %v430
        %v602 = vpop.f32.mrb[0].mxu0
        %v603 = vadd.f32 %v415, %v602
        %v604 = vpop.f32.mrb[0].mxu0
        %v605 = vadd.f32 %v415, %v604
        %606 = vmatprep.mubr.f32.mxu0 0.0
        %607 = vmatmul.mubr.f32.gmra.mrb[0].mxu0 %v433
        %v608 = vpop.f32.mrb[0].mxu0
        %v609 = vadd.f32 %v420, %v608
        %v610 = vpop.f32.mrb[0].mxu0
        %v611 = vadd.f32 %v420, %v610
        %612 = vdwg.mxu0
        %v613 = vmax.f32 %v502, 0.0
        %v614 = vmax.f32 %v504, 0.0
        %v615 = vmax.f32 %v591, 0.0
        %v616 = vmax.f32 %v593, 0.0
        %v617 = vmax.f32 %v508, 0.0
        %v618 = vmax.f32 %v510, 0.0
        %v619 = vmax.f32 %v597, 0.0
        %v620 = vmax.f32 %v599, 0.0
        %v621 = vmax.f32 %v514, 0.0
        %v622 = vmax.f32 %v516, 0.0
        %v623 = vmax.f32 %v603, 0.0
        %v624 = vmax.f32 %v605, 0.0
        %v625 = vmax.f32 %v520, 0.0
        %v626 = vmax.f32 %v522, 0.0
        %v627 = vmax.f32 %v609, 0.0
        %v628 = vmax.f32 %v611, 0.0
        %v629 = vld [vmem:[#allocation4] sm:$0xff]
        %v630 = vld [vmem:[#allocation4 + $0x8] sm:$0xff]
        %v631 = vld [vmem:[%s5] sm:$0xff]
        %v632 = vld [vmem:[%s5 + $0x8] sm:$0xff]
        %634 = vset.pattern.permute.xlu0 0
        %635 = vperm.xlu0 %634, %v631
        %v636 = vpop.permute.xlu0 %635
        %639 = vset.pattern.permute.xlu0 0
        %640 = vperm.xlu0 %639, %v632
        %v641 = vpop.permute.xlu0 %640
        %vm643 = vcmask 261120
        %v645 = vsel %vm643, %v629, 0
        %v648 = vsel %vm643, %v630, 0
        %650 = vmatprep.subr.mxu0 %v614
        %651 = vmatpush1.msra.mxu0 %v613
        %652 = vmatprep.subr.mxu0 %v618
        %653 = vmatpush1.msra.mxu0 %v617
        %654 = vmatprep.subr.mxu0 %v622
        %655 = vmatpush1.msra.mxu0 %v621
        %656 = vmatprep.subr.mxu0 %v626
        %657 = vmatpush1.msra.mxu0 %v625
        %658 = vmatprep.subr.mxu0 0.0
        %659 = vmatpush1.msra.mxu0 0.0
        %660 = vmatprep.subr.mxu0 0.0
        %661 = vmatpush1.msra.mxu0 0.0
        %662 = vmatprep.subr.mxu0 0.0
        %663 = vmatpush1.msra.mxu0 0.0
        %664 = vmatprep.subr.mxu0 0.0
        %665 = vmatpush1.msra.mxu0 0.0
        %666 = vmatprep.subr.mxu0 0.0
        %667 = vmatpush1.msra.mxu0 0.0
        %668 = vmatprep.subr.mxu0 0.0
        %669 = vmatpush1.msra.mxu0 0.0
        %670 = vmatprep.subr.mxu0 0.0
        %671 = vmatpush1.msra.mxu0 0.0
        %672 = vmatprep.subr.mxu0 0.0
        %673 = vmatpush1.msra.mxu0 0.0
        %674 = vmatprep.subr.mxu0 0.0
        %675 = vmatpush1.msra.mxu0 0.0
        %676 = vmatprep.subr.mxu0 0.0
        %677 = vmatpush1.msra.mxu0 0.0
        %678 = vmatprep.subr.mxu0 0.0
        %679 = vmatpush1.msra.mxu0 0.0
        %680 = vmatprep.subr.mxu0 0.0
        %681 = vmatpush1.msra.mxu0 0.0
        %682 = vmatprep.subr.mxu0 0.0
        %683 = vmatpush1.msra.mxu0 0.0
        %684 = vmatprep.subr.mxu0 0.0
        %685 = vmatpush1.msra.mxu0 0.0
        %686 = vmatprep.subr.mxu0 0.0
        %687 = vmatpush1.msra.mxu0 0.0
        %688 = vmatprep.subr.mxu0 0.0
        %689 = vmatpush1.msra.mxu0 0.0
        %690 = vmatprep.subr.mxu0 0.0
        %691 = vmatpush1.msra.mxu0 0.0
        %692 = vmatprep.subr.mxu0 0.0
        %693 = vmatpush1.msra.mxu0 0.0
        %694 = vmatprep.subr.mxu0 0.0
        %695 = vmatpush1.msra.mxu0 0.0
        %696 = vmatprep.subr.mxu0 0.0
        %697 = vmatpush1.msra.mxu0 0.0
        %698 = vmatprep.subr.mxu0 0.0
        %699 = vmatpush1.msra.mxu0 0.0
        %700 = vmatprep.subr.mxu0 0.0
        %701 = vmatpush1.msra.mxu0 0.0
        %702 = vmatprep.subr.mxu0 0.0
        %703 = vmatpush1.msra.mxu0 0.0
        %704 = vmatprep.subr.mxu0 0.0
        %705 = vmatpush1.msra.mxu0 0.0
        %706 = vmatprep.subr.mxu0 0.0
        %707 = vmatpush1.msra.mxu0 0.0
        %708 = vmatprep.subr.mxu0 0.0
        %709 = vmatpush1.msra.mxu0 0.0
        %710 = vmatprep.subr.mxu0 0.0
        %711 = vmatpush1.msra.mxu0 0.0
        %712 = vmatprep.subr.mxu0 0.0
        %713 = vmatpush1.msra.mxu0 0.0
        %714 = vmatprep.mubr.f32.mxu0 0.0
        %715 = vmatmul.mubr.f32.gmra.mrb[0].mxu0 %v645
        %v716 = vpop.f32.mrb[0].mxu0
        %v717 = vadd.f32 %v636, %v716
        %v718 = vpop.f32.mrb[0].mxu0
        %v719 = vadd.f32 %v636, %v718
        %720 = vmatprep.mubr.f32.mxu0 0.0
        %721 = vmatmul.mubr.f32.gmra.mrb[0].mxu0 %v648
        %v722 = vpop.f32.mrb[0].mxu0
        %v723 = vadd.f32 %v641, %v722
        %v724 = vpop.f32.mrb[0].mxu0
        %v725 = vadd.f32 %v641, %v724
        %726 = vdwg.mxu0
        %727 = vmatprep.subr.mxu0 %v616
        %728 = vmatpush1.msra.mxu0 %v615
        %729 = vmatprep.subr.mxu0 %v620
        %730 = vmatpush1.msra.mxu0 %v619
        %731 = vmatprep.subr.mxu0 %v624
        %732 = vmatpush1.msra.mxu0 %v623
        %733 = vmatprep.subr.mxu0 %v628
        %734 = vmatpush1.msra.mxu0 %v627
        %735 = vmatprep.subr.mxu0 0.0
        %736 = vmatpush1.msra.mxu0 0.0
        %737 = vmatprep.subr.mxu0 0.0
        %738 = vmatpush1.msra.mxu0 0.0
        %739 = vmatprep.subr.mxu0 0.0
        %740 = vmatpush1.msra.mxu0 0.0
        %741 = vmatprep.subr.mxu0 0.0
        %742 = vmatpush1.msra.mxu0 0.0
        %743 = vmatprep.subr.mxu0 0.0
        %744 = vmatpush1.msra.mxu0 0.0
        %745 = vmatprep.subr.mxu0 0.0
        %746 = vmatpush1.msra.mxu0 0.0
        %747 = vmatprep.subr.mxu0 0.0
        %748 = vmatpush1.msra.mxu0 0.0
        %749 = vmatprep.subr.mxu0 0.0
        %750 = vmatpush1.msra.mxu0 0.0
        %751 = vmatprep.subr.mxu0 0.0
        %752 = vmatpush1.msra.mxu0 0.0
        %753 = vmatprep.subr.mxu0 0.0
        %754 = vmatpush1.msra.mxu0 0.0
        %755 = vmatprep.subr.mxu0 0.0
        %756 = vmatpush1.msra.mxu0 0.0
        %757 = vmatprep.subr.mxu0 0.0
        %758 = vmatpush1.msra.mxu0 0.0
        %759 = vmatprep.subr.mxu0 0.0
        %760 = vmatpush1.msra.mxu0 0.0
        %761 = vmatprep.subr.mxu0 0.0
        %762 = vmatpush1.msra.mxu0 0.0
        %763 = vmatprep.subr.mxu0 0.0
        %764 = vmatpush1.msra.mxu0 0.0
        %765 = vmatprep.subr.mxu0 0.0
        %766 = vmatpush1.msra.mxu0 0.0
        %767 = vmatprep.subr.mxu0 0.0
        %768 = vmatpush1.msra.mxu0 0.0
        %769 = vmatprep.subr.mxu0 0.0
        %770 = vmatpush1.msra.mxu0 0.0
        %771 = vmatprep.subr.mxu0 0.0
        %772 = vmatpush1.msra.mxu0 0.0
        %773 = vmatprep.subr.mxu0 0.0
        %774 = vmatpush1.msra.mxu0 0.0
        %775 = vmatprep.subr.mxu0 0.0
        %776 = vmatpush1.msra.mxu0 0.0
        %777 = vmatprep.subr.mxu0 0.0
        %778 = vmatpush1.msra.mxu0 0.0
        %779 = vmatprep.subr.mxu0 0.0
        %780 = vmatpush1.msra.mxu0 0.0
        %781 = vmatprep.subr.mxu0 0.0
        %782 = vmatpush1.msra.mxu0 0.0
        %783 = vmatprep.subr.mxu0 0.0
        %784 = vmatpush1.msra.mxu0 0.0
        %785 = vmatprep.subr.mxu0 0.0
        %786 = vmatpush1.msra.mxu0 0.0
        %787 = vmatprep.subr.mxu0 0.0
        %788 = vmatpush1.msra.mxu0 0.0
        %789 = vmatprep.subr.mxu0 0.0
        %790 = vmatpush1.msra.mxu0 0.0
        %791 = vmatprep.mubr.f32.mxu0 0.0
        %792 = vmatmul.mubr.f32.gmra.mrb[0].mxu0 %v645
        %v793 = vpop.f32.mrb[0].mxu0
        %v794 = vadd.f32 %v636, %v793
        %v795 = vpop.f32.mrb[0].mxu0
        %v796 = vadd.f32 %v636, %v795
        %797 = vmatprep.mubr.f32.mxu0 0.0
        %798 = vmatmul.mubr.f32.gmra.mrb[0].mxu0 %v648
        %v799 = vpop.f32.mrb[0].mxu0
        %v800 = vadd.f32 %v641, %v799
        %v801 = vpop.f32.mrb[0].mxu0
        %v802 = vadd.f32 %v641, %v801
        %803 = vdwg.mxu0
        %v804 = vxor.u32 %v717, 2147483648
        %v805 = vxor.u32 %v719, 2147483648
        %v806 = vxor.u32 %v794, 2147483648
        %v807 = vxor.u32 %v796, 2147483648
        %v808 = vxor.u32 %v723, 2147483648
        %v809 = vxor.u32 %v725, 2147483648
        %v810 = vxor.u32 %v800, 2147483648
        %v811 = vxor.u32 %v802, 2147483648
        %v812 = vmul.f32 %v804, 1.442695
        %v813 = vpow.pop %v812
        %v814 = vmul.f32 %v805, 1.442695
        %v815 = vpow.pop %v814
        %v816 = vmul.f32 %v806, 1.442695
        %v817 = vpow.pop %v816
        %v818 = vmul.f32 %v807, 1.442695
        %v819 = vpow.pop %v818
        %v820 = vmul.f32 %v808, 1.442695
        %v821 = vpow.pop %v820
        %v822 = vmul.f32 %v809, 1.442695
        %v823 = vpow.pop %v822
        %v824 = vmul.f32 %v810, 1.442695
        %v825 = vpow.pop %v824
        %v826 = vmul.f32 %v811, 1.442695
        %v827 = vpow.pop %v826
        %v828 = vadd.f32 %v813, 1.0
        %v829 = vadd.f32 %v815, 1.0
        %v830 = vadd.f32 %v817, 1.0
        %v831 = vadd.f32 %v819, 1.0
        %v832 = vadd.f32 %v821, 1.0
        %v833 = vadd.f32 %v823, 1.0
        %v834 = vadd.f32 %v825, 1.0
        %v835 = vadd.f32 %v827, 1.0
        %v836 = vrcp.pop %v828
        %v837 = vmul.f32 1.0, %v836
        %v838 = vrcp.pop %v829
        %v839 = vmul.f32 1.0, %v838
        %v840 = vrcp.pop %v830
        %v841 = vmul.f32 1.0, %v840
        %v842 = vrcp.pop %v831
        %v843 = vmul.f32 1.0, %v842
        %v844 = vrcp.pop %v832
        %v845 = vmul.f32 1.0, %v844
        %v846 = vrcp.pop %v833
        %v847 = vmul.f32 1.0, %v846
        %v848 = vrcp.pop %v834
        %v849 = vmul.f32 1.0, %v848
        %v850 = vrcp.pop %v835
        %v851 = vmul.f32 1.0, %v850
        %v852 = vld [vmem:[%s1] sm:$0xf]
        %v854 = vlaneseq
        %v855 = vshrl.u32 %v854, 7
        %v856 = vsub.s32 0, %v855
        %v857 = vrot.slane %v852, %v856
        %v858 = vlaneseq
        %v859 = vshrl.u32 %v858, 7
        %v860 = vsub.s32 1, %v859
        %v861 = vrot.slane %v852, %v860
        %v862 = vlaneseq
        %v863 = vshrl.u32 %v862, 7
        %v864 = vsub.s32 2, %v863
        %v865 = vrot.slane %v852, %v864
        %v866 = vlaneseq
        %v867 = vshrl.u32 %v866, 7
        %v868 = vsub.s32 3, %v867
        %v869 = vrot.slane %v852, %v868
        %v874 = vmul.f32 %v837, %v857
        %v875 = vmul.f32 %v839, %v861
        %v876 = vmul.f32 %v841, %v865
        %v877 = vmul.f32 %v843, %v869
        %v878 = vmul.f32 %v845, %v857
        %v879 = vmul.f32 %v847, %v861
        %v880 = vmul.f32 %v849, %v865
        %v881 = vmul.f32 %v851, %v869
        %882 = vst [vmem:[#allocation2] sm:$0xff] %v874
        %883 = vst [vmem:[#allocation2 + $0x8] sm:$0xff] %v875
        %884 = vst [vmem:[#allocation2 + $0x10] sm:$0xff] %v876
        %vm885 = vcmask 277504
        %886 = vst.msk [vmem:[#allocation2 + $0x18] sm:$0xff] %vm885, %v877
        %887 = vst [vmem:[#allocation2 + $0x20] sm:$0xff] %v878
        %888 = vst [vmem:[#allocation2 + $0x28] sm:$0xff] %v879
        %889 = vst [vmem:[#allocation2 + $0x30] sm:$0xff] %v880
        %890 = vst.msk [vmem:[#allocation2 + $0x38] sm:$0xff] %vm885, %v881
        %v891 = vld [vmem:[#allocation2] sm:$0xff]
        %v892 = vld [vmem:[#allocation2 + $0x8] sm:$0xff]
        %v893 = vld [vmem:[#allocation2 + $0x10] sm:$0xff]
        %v894 = vld [vmem:[#allocation2 + $0x20] sm:$0xff]
        %v895 = vld [vmem:[#allocation2 + $0x28] sm:$0xff]
        %v896 = vld [vmem:[#allocation2 + $0x30] sm:$0xff]
        %897 = vst [vmem:[#allocation3] sm:$0xff] %v891
        %898 = vst [vmem:[#allocation3 + $0x8] sm:$0xff] %v892
        %vm899 = vcmask 859136
        %900 = vst.msk [vmem:[#allocation3 + $0x10] sm:$0xff] %vm899, %v893
        %901 = vst [vmem:[#allocation3 + $0x18] sm:$0xff] %v894
        %902 = vst [vmem:[#allocation3 + $0x20] sm:$0xff] %v895
        %903 = vst.msk [vmem:[#allocation3 + $0x28] sm:$0xff] %vm899, %v896
        %v904 = vld [vmem:[#allocation2] sm:$0xff]
        %v905 = vld [vmem:[#allocation2 + $0x8] sm:$0xff]
        %v906 = vld [vmem:[#allocation2 + $0x10] sm:$0xff]
        %v907 = vld [vmem:[#allocation2 + $0x20] sm:$0xff]
        %v908 = vld [vmem:[#allocation2 + $0x28] sm:$0xff]
        %v909 = vld [vmem:[#allocation2 + $0x30] sm:$0xff]
        %916 = vrot.lane.b32.xlu0 %v904, 127
        %v917 = vpop.permute.xlu0 %916
        %918 = vrot.lane.b32.xlu0 %v905, 127
        %v919 = vpop.permute.xlu0 %918
        %920 = vrot.lane.b32.xlu0 %v906, 127
        %v921 = vpop.permute.xlu0 %920
        %922 = vrot.lane.b32.xlu0 %v907, 127
        %v923 = vpop.permute.xlu0 %922
        %924 = vrot.lane.b32.xlu0 %v908, 127
        %v925 = vpop.permute.xlu0 %924
        %926 = vrot.lane.b32.xlu0 %v909, 127
        %v927 = vpop.permute.xlu0 %926
        %vm928 = vcmask 1039360
        %v929 = vsel %vm928, %v917, %v919
        %v930 = vsel %vm928, %v919, %v921
        %v931 = vsel %vm928, %v923, %v925
        %v932 = vsel %vm928, %v925, %v927
        %939 = vst [vmem:[#allocation3 + $0x30] sm:$0xff] %v929
        %940 = vst [vmem:[#allocation3 + $0x38] sm:$0xff] %v930
        %941 = vst.msk [vmem:[#allocation3 + $0x40] sm:$0xff] %vm899, %v921
        %942 = vst [vmem:[#allocation3 + $0x48] sm:$0xff] %v931
        %943 = vst [vmem:[#allocation3 + $0x50] sm:$0xff] %v932
        %944 = vst.msk [vmem:[#allocation3 + $0x58] sm:$0xff] %vm899, %v927
        %v945 = vld [vmem:[#allocation2] sm:$0xff]
        %v946 = vld [vmem:[#allocation2 + $0x8] sm:$0xff]
        %v947 = vld [vmem:[#allocation2 + $0x10] sm:$0xff]
        %v948 = vld [vmem:[#allocation2 + $0x20] sm:$0xff]
        %v949 = vld [vmem:[#allocation2 + $0x28] sm:$0xff]
        %v950 = vld [vmem:[#allocation2 + $0x30] sm:$0xff]
        %957 = vrot.lane.b32.xlu0 %v945, 126
        %v958 = vpop.permute.xlu0 %957
        %959 = vrot.lane.b32.xlu0 %v946, 126
        %v960 = vpop.permute.xlu0 %959
        %961 = vrot.lane.b32.xlu0 %v947, 126
        %v962 = vpop.permute.xlu0 %961
        %963 = vrot.lane.b32.xlu0 %v948, 126
        %v964 = vpop.permute.xlu0 %963
        %965 = vrot.lane.b32.xlu0 %v949, 126
        %v966 = vpop.permute.xlu0 %965
        %967 = vrot.lane.b32.xlu0 %v950, 126
        %v968 = vpop.permute.xlu0 %967
        %vm969 = vcmask 1031168
        %v970 = vsel %vm969, %v958, %v960
        %v971 = vsel %vm969, %v960, %v962
        %v972 = vsel %vm969, %v964, %v966
        %v973 = vsel %vm969, %v966, %v968
        %980 = vst [vmem:[#allocation3 + $0x60] sm:$0xff] %v970
        %981 = vst [vmem:[#allocation3 + $0x68] sm:$0xff] %v971
        %982 = vst.msk [vmem:[#allocation3 + $0x70] sm:$0xff] %vm899, %v962
        %983 = vst [vmem:[#allocation3 + $0x78] sm:$0xff] %v972
        %984 = vst [vmem:[#allocation3 + $0x80] sm:$0xff] %v973
        %985 = vst.msk [vmem:[#allocation3 + $0x88] sm:$0xff] %vm899, %v968
        %v986 = vld [vmem:[#allocation2] sm:$0xff]
        %v987 = vld [vmem:[#allocation2 + $0x8] sm:$0xff]
        %v988 = vld [vmem:[#allocation2 + $0x10] sm:$0xff]
        %v989 = vld [vmem:[#allocation2 + $0x20] sm:$0xff]
        %v990 = vld [vmem:[#allocation2 + $0x28] sm:$0xff]
        %v991 = vld [vmem:[#allocation2 + $0x30] sm:$0xff]
        %998 = vrot.lane.b32.xlu0 %v986, 109
        %v999 = vpop.permute.xlu0 %998
        %1000 = vrot.lane.b32.xlu0 %v987, 109
        %v1001 = vpop.permute.xlu0 %1000
        %1002 = vrot.lane.b32.xlu0 %v988, 109
        %v1003 = vpop.permute.xlu0 %1002
        %1004 = vrot.lane.b32.xlu0 %v989, 109
        %v1005 = vpop.permute.xlu0 %1004
        %1006 = vrot.lane.b32.xlu0 %v990, 109
        %v1007 = vpop.permute.xlu0 %1006
        %1008 = vrot.lane.b32.xlu0 %v991, 109
        %v1009 = vpop.permute.xlu0 %1008
        %vm1010 = vcmask 891904
        %v1011 = vsel %vm1010, %v999, %v1001
        %v1012 = vsel %vm1010, %v1001, %v1003
        %v1013 = vsel %vm1010, %v1005, %v1007
        %v1014 = vsel %vm1010, %v1007, %v1009
        %1021 = vst [vmem:[#allocation3 + $0x90] sm:$0xff] %v1011
        %1022 = vst [vmem:[#allocation3 + $0x98] sm:$0xff] %v1012
        %1023 = vst.msk [vmem:[#allocation3 + $0xa0] sm:$0xff] %vm899, %v1003
        %1024 = vst [vmem:[#allocation3 + $0xa8] sm:$0xff] %v1013
        %1025 = vst [vmem:[#allocation3 + $0xb0] sm:$0xff] %v1014
        %1026 = vst.msk [vmem:[#allocation3 + $0xb8] sm:$0xff] %vm899, %v1009
        %v1027 = vld [vmem:[#allocation2] sm:$0xff]
        %v1028 = vld [vmem:[#allocation2 + $0x8] sm:$0xff]
        %v1029 = vld [vmem:[#allocation2 + $0x10] sm:$0xff]
        %v1030 = vld [vmem:[#allocation2 + $0x20] sm:$0xff]
        %v1031 = vld [vmem:[#allocation2 + $0x28] sm:$0xff]
        %v1032 = vld [vmem:[#allocation2 + $0x30] sm:$0xff]
        %1039 = vrot.lane.b32.xlu0 %v1027, 108
        %v1040 = vpop.permute.xlu0 %1039
        %1041 = vrot.lane.b32.xlu0 %v1028, 108
        %v1042 = vpop.permute.xlu0 %1041
        %1043 = vrot.lane.b32.xlu0 %v1029, 108
        %v1044 = vpop.permute.xlu0 %1043
        %1045 = vrot.lane.b32.xlu0 %v1030, 108
        %v1046 = vpop.permute.xlu0 %1045
        %1047 = vrot.lane.b32.xlu0 %v1031, 108
        %v1048 = vpop.permute.xlu0 %1047
        %1049 = vrot.lane.b32.xlu0 %v1032, 108
        %v1050 = vpop.permute.xlu0 %1049
        %vm1051 = vcmask 883712
        %v1052 = vsel %vm1051, %v1040, %v1042
        %v1053 = vsel %vm1051, %v1042, %v1044
        %v1054 = vsel %vm1051, %v1046, %v1048
        %v1055 = vsel %vm1051, %v1048, %v1050
        %1062 = vst [vmem:[#allocation3 + $0xc0] sm:$0xff] %v1052
        %1063 = vst [vmem:[#allocation3 + $0xc8] sm:$0xff] %v1053
        %1064 = vst.msk [vmem:[#allocation3 + $0xd0] sm:$0xff] %vm899, %v1044
        %1065 = vst [vmem:[#allocation3 + $0xd8] sm:$0xff] %v1054
        %1066 = vst [vmem:[#allocation3 + $0xe0] sm:$0xff] %v1055
        %1067 = vst.msk [vmem:[#allocation3 + $0xe8] sm:$0xff] %vm899, %v1050
        %v1068 = vld [vmem:[#allocation2] sm:$0xff]
        %v1069 = vld [vmem:[#allocation2 + $0x8] sm:$0xff]
        %v1070 = vld [vmem:[#allocation2 + $0x10] sm:$0xff]
        %v1071 = vld [vmem:[#allocation2 + $0x20] sm:$0xff]
        %v1072 = vld [vmem:[#allocation2 + $0x28] sm:$0xff]
        %v1073 = vld [vmem:[#allocation2 + $0x30] sm:$0xff]
        %1080 = vrot.lane.b32.xlu0 %v1068, 107
        %v1081 = vpop.permute.xlu0 %1080
        %1082 = vrot.lane.b32.xlu0 %v1069, 107
        %v1083 = vpop.permute.xlu0 %1082
        %1084 = vrot.lane.b32.xlu0 %v1070, 107
        %v1085 = vpop.permute.xlu0 %1084
        %1086 = vrot.lane.b32.xlu0 %v1071, 107
        %v1087 = vpop.permute.xlu0 %1086
        %1088 = vrot.lane.b32.xlu0 %v1072, 107
        %v1089 = vpop.permute.xlu0 %1088
        %1090 = vrot.lane.b32.xlu0 %v1073, 107
        %v1091 = vpop.permute.xlu0 %1090
        %vm1092 = vcmask 875520
        %v1093 = vsel %vm1092, %v1081, %v1083
        %v1094 = vsel %vm1092, %v1083, %v1085
        %v1095 = vsel %vm1092, %v1087, %v1089
        %v1096 = vsel %vm1092, %v1089, %v1091
        %1103 = vst [vmem:[#allocation3 + $0xf0] sm:$0xff] %v1093
        %1104 = vst [vmem:[#allocation3 + $0xf8] sm:$0xff] %v1094
        %1105 = vst.msk [vmem:[#allocation3 + $0x100] sm:$0xff] %vm899, %v1085
        %1106 = vst [vmem:[#allocation3 + $0x108] sm:$0xff] %v1095
        %1107 = vst [vmem:[#allocation3 + $0x110] sm:$0xff] %v1096
        %1108 = vst.msk [vmem:[#allocation3 + $0x118] sm:$0xff] %vm899, %v1091
        %v1109 = vld [vmem:[#allocation2] sm:$0xff]
        %v1110 = vld [vmem:[#allocation2 + $0x8] sm:$0xff]
        %v1111 = vld [vmem:[#allocation2 + $0x10] sm:$0xff]
        %v1112 = vld [vmem:[#allocation2 + $0x18] sm:$0xff]
        %v1113 = vld [vmem:[#allocation2 + $0x20] sm:$0xff]
        %v1114 = vld [vmem:[#allocation2 + $0x28] sm:$0xff]
        %v1115 = vld [vmem:[#allocation2 + $0x30] sm:$0xff]
        %v1116 = vld [vmem:[#allocation2 + $0x38] sm:$0xff]
        %1125 = vrot.lane.b32.xlu0 %v1109, 90
        %v1126 = vpop.permute.xlu0 %1125
        %1127 = vrot.lane.b32.xlu0 %v1110, 90
        %v1128 = vpop.permute.xlu0 %1127
        %1129 = vrot.lane.b32.xlu0 %v1111, 90
        %v1130 = vpop.permute.xlu0 %1129
        %1131 = vrot.lane.b32.xlu0 %v1112, 90
        %v1132 = vpop.permute.xlu0 %1131
        %1133 = vrot.lane.b32.xlu0 %v1113, 90
        %v1134 = vpop.permute.xlu0 %1133
        %1135 = vrot.lane.b32.xlu0 %v1114, 90
        %v1136 = vpop.permute.xlu0 %1135
        %1137 = vrot.lane.b32.xlu0 %v1115, 90
        %v1138 = vpop.permute.xlu0 %1137
        %1139 = vrot.lane.b32.xlu0 %v1116, 90
        %v1140 = vpop.permute.xlu0 %1139
        %vm1141 = vcmask 736256
        %v1142 = vsel %vm1141, %v1126, %v1128
        %v1143 = vsel %vm1141, %v1128, %v1130
        %v1144 = vsel %vm1141, %v1130, %v1132
        %v1145 = vsel %vm1141, %v1134, %v1136
        %v1146 = vsel %vm1141, %v1136, %v1138
        %v1147 = vsel %vm1141, %v1138, %v1140
        %1154 = vst [vmem:[#allocation3 + $0x120] sm:$0xff] %v1142
        %1155 = vst [vmem:[#allocation3 + $0x128] sm:$0xff] %v1143
        %1156 = vst.msk [vmem:[#allocation3 + $0x130] sm:$0xff] %vm899, %v1144
        %1157 = vst [vmem:[#allocation3 + $0x138] sm:$0xff] %v1145
        %1158 = vst [vmem:[#allocation3 + $0x140] sm:$0xff] %v1146
        %1159 = vst.msk [vmem:[#allocation3 + $0x148] sm:$0xff] %vm899, %v1147
        %v1160 = vld [vmem:[#allocation2] sm:$0xff]
        %v1161 = vld [vmem:[#allocation2 + $0x8] sm:$0xff]
        %v1162 = vld [vmem:[#allocation2 + $0x10] sm:$0xff]
        %v1163 = vld [vmem:[#allocation2 + $0x18] sm:$0xff]
        %v1164 = vld [vmem:[#allocation2 + $0x20] sm:$0xff]
        %v1165 = vld [vmem:[#allocation2 + $0x28] sm:$0xff]
        %v1166 = vld [vmem:[#allocation2 + $0x30] sm:$0xff]
        %v1167 = vld [vmem:[#allocation2 + $0x38] sm:$0xff]
        %1176 = vrot.lane.b32.xlu0 %v1160, 89
        %v1177 = vpop.permute.xlu0 %1176
        %1178 = vrot.lane.b32.xlu0 %v1161, 89
        %v1179 = vpop.permute.xlu0 %1178
        %1180 = vrot.lane.b32.xlu0 %v1162, 89
        %v1181 = vpop.permute.xlu0 %1180
        %1182 = vrot.lane.b32.xlu0 %v1163, 89
        %v1183 = vpop.permute.xlu0 %1182
        %1184 = vrot.lane.b32.xlu0 %v1164, 89
        %v1185 = vpop.permute.xlu0 %1184
        %1186 = vrot.lane.b32.xlu0 %v1165, 89
        %v1187 = vpop.permute.xlu0 %1186
        %1188 = vrot.lane.b32.xlu0 %v1166, 89
        %v1189 = vpop.permute.xlu0 %1188
        %1190 = vrot.lane.b32.xlu0 %v1167, 89
        %v1191 = vpop.permute.xlu0 %1190
        %vm1192 = vcmask 728064
        %v1193 = vsel %vm1192, %v1177, %v1179
        %v1194 = vsel %vm1192, %v1179, %v1181
        %v1195 = vsel %vm1192, %v1181, %v1183
        %v1196 = vsel %vm1192, %v1185, %v1187
        %v1197 = vsel %vm1192, %v1187, %v1189
        %v1198 = vsel %vm1192, %v1189, %v1191
        %1205 = vst [vmem:[#allocation3 + $0x150] sm:$0xff] %v1193
        %1206 = vst [vmem:[#allocation3 + $0x158] sm:$0xff] %v1194
        %1207 = vst.msk [vmem:[#allocation3 + $0x160] sm:$0xff] %vm899, %v1195
        %1208 = vst [vmem:[#allocation3 + $0x168] sm:$0xff] %v1196
        %1209 = vst [vmem:[#allocation3 + $0x170] sm:$0xff] %v1197
        %1210 = vst.msk [vmem:[#allocation3 + $0x178] sm:$0xff] %vm899, %v1198
        %v1211 = vld [vmem:[#allocation2] sm:$0xff]
        %v1212 = vld [vmem:[#allocation2 + $0x8] sm:$0xff]
        %v1213 = vld [vmem:[#allocation2 + $0x10] sm:$0xff]
        %v1214 = vld [vmem:[#allocation2 + $0x18] sm:$0xff]
        %v1215 = vld [vmem:[#allocation2 + $0x20] sm:$0xff]
        %v1216 = vld [vmem:[#allocation2 + $0x28] sm:$0xff]
        %v1217 = vld [vmem:[#allocation2 + $0x30] sm:$0xff]
        %v1218 = vld [vmem:[#allocation2 + $0x38] sm:$0xff]
        %1227 = vrot.lane.b32.xlu0 %v1211, 88
        %v1228 = vpop.permute.xlu0 %1227
        %1229 = vrot.lane.b32.xlu0 %v1212, 88
        %v1230 = vpop.permute.xlu0 %1229
        %1231 = vrot.lane.b32.xlu0 %v1213, 88
        %v1232 = vpop.permute.xlu0 %1231
        %1233 = vrot.lane.b32.xlu0 %v1214, 88
        %v1234 = vpop.permute.xlu0 %1233
        %1235 = vrot.lane.b32.xlu0 %v1215, 88
        %v1236 = vpop.permute.xlu0 %1235
        %1237 = vrot.lane.b32.xlu0 %v1216, 88
        %v1238 = vpop.permute.xlu0 %1237
        %1239 = vrot.lane.b32.xlu0 %v1217, 88
        %v1240 = vpop.permute.xlu0 %1239
        %1241 = vrot.lane.b32.xlu0 %v1218, 88
        %v1242 = vpop.permute.xlu0 %1241
        %vm1243 = vcmask 719872
        %v1244 = vsel %vm1243, %v1228, %v1230
        %v1245 = vsel %vm1243, %v1230, %v1232
        %v1246 = vsel %vm1243, %v1232, %v1234
        %v1247 = vsel %vm1243, %v1236, %v1238
        %v1248 = vsel %vm1243, %v1238, %v1240
        %v1249 = vsel %vm1243, %v1240, %v1242
        %1256 = vst [vmem:[#allocation3 + $0x180] sm:$0xff] %v1244
        %1257 = vst [vmem:[#allocation3 + $0x188] sm:$0xff] %v1245
        %1258 = vst.msk [vmem:[#allocation3 + $0x190] sm:$0xff] %vm899, %v1246
        %1259 = vst [vmem:[#allocation3 + $0x198] sm:$0xff] %v1247
        %1260 = vst [vmem:[#allocation3 + $0x1a0] sm:$0xff] %v1248
        %1261 = vst.msk [vmem:[#allocation3 + $0x1a8] sm:$0xff] %vm899, %v1249
        %v1262 = vld [vmem:[#allocation6] sm:$0xff]
        %v1263 = vld [vmem:[#allocation6 + $0x8] sm:$0xff]
        %v1264 = vld [vmem:[#allocation6 + $0x10] sm:$0xff]
        %v1265 = vld [vmem:[#allocation6 + $0x18] sm:$0xff]
        %v1266 = vld [vmem:[#allocation6 + $0x20] sm:$0xff]
        %v1267 = vld [vmem:[#allocation6 + $0x28] sm:$0xff]
        %v1268 = vld [vmem:[#allocation6 + $0x30] sm:$0xff]
        %v1269 = vld [vmem:[#allocation6 + $0x38] sm:$0xff]
        %v1270 = vld [vmem:[#allocation3] sm:$0xff]
        %v1271 = vld [vmem:[#allocation3 + $0x8] sm:$0xff]
        %v1272 = vld [vmem:[#allocation3 + $0x10] sm:$0xff]
        %v1273 = vld [vmem:[#allocation3 + $0x18] sm:$0xff]
        %v1274 = vld [vmem:[#allocation3 + $0x20] sm:$0xff]
        %v1275 = vld [vmem:[#allocation3 + $0x28] sm:$0xff]
        %v1276 = vld [vmem:[#allocation3 + $0x30] sm:$0xff]
        %v1277 = vld [vmem:[#allocation3 + $0x38] sm:$0xff]
        %v1278 = vld [vmem:[#allocation3 + $0x40] sm:$0xff]
        %v1279 = vld [vmem:[#allocation3 + $0x48] sm:$0xff]
        %v1280 = vld [vmem:[#allocation3 + $0x50] sm:$0xff]
        %v1281 = vld [vmem:[#allocation3 + $0x58] sm:$0xff]
        %v1282 = vld [vmem:[#allocation3 + $0x60] sm:$0xff]
        %v1283 = vld [vmem:[#allocation3 + $0x68] sm:$0xff]
        %v1284 = vld [vmem:[#allocation3 + $0x70] sm:$0xff]
        %v1285 = vld [vmem:[#allocation3 + $0x78] sm:$0xff]
        %v1286 = vld [vmem:[#allocation3 + $0x80] sm:$0xff]
        %v1287 = vld [vmem:[#allocation3 + $0x88] sm:$0xff]
        %v1288 = vld [vmem:[#allocation3 + $0x90] sm:$0xff]
        %v1289 = vld [vmem:[#allocation3 + $0x98] sm:$0xff]
        %v1290 = vld [vmem:[#allocation3 + $0xa0] sm:$0xff]
        %v1291 = vld [vmem:[#allocation3 + $0xa8] sm:$0xff]
        %v1292 = vld [vmem:[#allocation3 + $0xb0] sm:$0xff]
        %v1293 = vld [vmem:[#allocation3 + $0xb8] sm:$0xff]
        %v1294 = vld [vmem:[#allocation3 + $0xc0] sm:$0xff]
        %v1295 = vld [vmem:[#allocation3 + $0xc8] sm:$0xff]
        %v1296 = vld [vmem:[#allocation3 + $0xd0] sm:$0xff]
        %v1297 = vld [vmem:[#allocation3 + $0xd8] sm:$0xff]
        %v1298 = vld [vmem:[#allocation3 + $0xe0] sm:$0xff]
        %v1299 = vld [vmem:[#allocation3 + $0xe8] sm:$0xff]
        %v1300 = vld [vmem:[#allocation3 + $0xf0] sm:$0xff]
        %v1301 = vld [vmem:[#allocation3 + $0xf8] sm:$0xff]
        %v1302 = vld [vmem:[#allocation3 + $0x100] sm:$0xff]
        %v1303 = vld [vmem:[#allocation3 + $0x108] sm:$0xff]
        %v1304 = vld [vmem:[#allocation3 + $0x110] sm:$0xff]
        %v1305 = vld [vmem:[#allocation3 + $0x118] sm:$0xff]
        %v1306 = vld [vmem:[#allocation3 + $0x120] sm:$0xff]
        %v1307 = vld [vmem:[#allocation3 + $0x128] sm:$0xff]
        %v1308 = vld [vmem:[#allocation3 + $0x130] sm:$0xff]
        %v1309 = vld [vmem:[#allocation3 + $0x138] sm:$0xff]
        %v1310 = vld [vmem:[#allocation3 + $0x140] sm:$0xff]
        %v1311 = vld [vmem:[#allocation3 + $0x148] sm:$0xff]
        %v1312 = vld [vmem:[#allocation3 + $0x150] sm:$0xff]
        %v1313 = vld [vmem:[#allocation3 + $0x158] sm:$0xff]
        %v1314 = vld [vmem:[#allocation3 + $0x160] sm:$0xff]
        %v1315 = vld [vmem:[#allocation3 + $0x168] sm:$0xff]
        %v1316 = vld [vmem:[#allocation3 + $0x170] sm:$0xff]
        %v1317 = vld [vmem:[#allocation3 + $0x178] sm:$0xff]
        %v1318 = vld [vmem:[#allocation3 + $0x180] sm:$0xff]
        %v1319 = vld [vmem:[#allocation3 + $0x188] sm:$0xff]
        %v1320 = vld [vmem:[#allocation3 + $0x190] sm:$0xff]
        %v1321 = vld [vmem:[#allocation3 + $0x198] sm:$0xff]
        %v1322 = vld [vmem:[#allocation3 + $0x1a0] sm:$0xff]
        %v1323 = vld [vmem:[#allocation3 + $0x1a8] sm:$0xff]
        %v1324 = vld [vmem:[%s7] sm:$0xff]
        %v1325 = vld [vmem:[%s7 + $0x8] sm:$0xff]
        %v1326 = vld [vmem:[%s7 + $0x10] sm:$0xff]
        %v1327 = vld [vmem:[%s7 + $0x18] sm:$0xff]
        %1329 = vset.pattern.permute.xlu0 0
        %1330 = vperm.xlu0 %1329, %v1324
        %v1331 = vpop.permute.xlu0 %1330
        %1334 = vset.pattern.permute.xlu0 0
        %1335 = vperm.xlu0 %1334, %v1325
        %v1336 = vpop.permute.xlu0 %1335
        %1339 = vset.pattern.permute.xlu0 0
        %1340 = vperm.xlu0 %1339, %v1326
        %v1341 = vpop.permute.xlu0 %1340
        %1344 = vset.pattern.permute.xlu0 0
        %1345 = vperm.xlu0 %1344, %v1327
        %v1346 = vpop.permute.xlu0 %1345
        %vm1348 = vcmask 130048
        %v1350 = vsel %vm1348, %v1263, 0
        %v1353 = vsel %vm1348, %v1265, 0
        %v1356 = vsel %vm1348, %v1267, 0
        %v1359 = vsel %vm1348, %v1269, 0
        %1361 = vmatprep.subr.mxu0 %v1271
        %1362 = vmatpush1.msra.mxu0 %v1270
        %1363 = vmatprep.subr.mxu0 %v1274
        %1364 = vmatpush1.msra.mxu0 %v1273
        %1365 = vmatprep.subr.mxu0 %v1277
        %1366 = vmatpush1.msra.mxu0 %v1276
        %1367 = vmatprep.subr.mxu0 %v1280
        %1368 = vmatpush1.msra.mxu0 %v1279
        %1369 = vmatprep.subr.mxu0 %v1283
        %1370 = vmatpush1.msra.mxu0 %v1282
        %1371 = vmatprep.subr.mxu0 %v1286
        %1372 = vmatpush1.msra.mxu0 %v1285
        %1373 = vmatprep.subr.mxu0 %v1289
        %1374 = vmatpush1.msra.mxu0 %v1288
        %1375 = vmatprep.subr.mxu0 %v1292
        %1376 = vmatpush1.msra.mxu0 %v1291
        %1377 = vmatprep.subr.mxu0 %v1295
        %1378 = vmatpush1.msra.mxu0 %v1294
        %1379 = vmatprep.subr.mxu0 %v1298
        %1380 = vmatpush1.msra.mxu0 %v1297
        %1381 = vmatprep.subr.mxu0 %v1301
        %1382 = vmatpush1.msra.mxu0 %v1300
        %1383 = vmatprep.subr.mxu0 %v1304
        %1384 = vmatpush1.msra.mxu0 %v1303
        %1385 = vmatprep.subr.mxu0 %v1307
        %1386 = vmatpush1.msra.mxu0 %v1306
        %1387 = vmatprep.subr.mxu0 %v1310
        %1388 = vmatpush1.msra.mxu0 %v1309
        %1389 = vmatprep.subr.mxu0 %v1313
        %1390 = vmatpush1.msra.mxu0 %v1312
        %1391 = vmatprep.subr.mxu0 %v1316
        %1392 = vmatpush1.msra.mxu0 %v1315
        %1393 = vmatprep.subr.mxu0 %v1319
        %1394 = vmatpush1.msra.mxu0 %v1318
        %1395 = vmatprep.subr.mxu0 %v1322
        %1396 = vmatpush1.msra.mxu0 %v1321
        %1397 = vmatprep.subr.mxu0 0.0
        %1398 = vmatpush1.msra.mxu0 0.0
        %1399 = vmatprep.subr.mxu0 0.0
        %1400 = vmatpush1.msra.mxu0 0.0
        %1401 = vmatprep.subr.mxu0 0.0
        %1402 = vmatpush1.msra.mxu0 0.0
        %1403 = vmatprep.subr.mxu0 0.0
        %1404 = vmatpush1.msra.mxu0 0.0
        %1405 = vmatprep.subr.mxu0 0.0
        %1406 = vmatpush1.msra.mxu0 0.0
        %1407 = vmatprep.subr.mxu0 0.0
        %1408 = vmatpush1.msra.mxu0 0.0
        %1409 = vmatprep.subr.mxu0 0.0
        %1410 = vmatpush1.msra.mxu0 0.0
        %1411 = vmatprep.subr.mxu0 0.0
        %1412 = vmatpush1.msra.mxu0 0.0
        %1413 = vmatprep.subr.mxu0 0.0
        %1414 = vmatpush1.msra.mxu0 0.0
        %1415 = vmatprep.subr.mxu0 0.0
        %1416 = vmatpush1.msra.mxu0 0.0
        %1417 = vmatprep.subr.mxu0 0.0
        %1418 = vmatpush1.msra.mxu0 0.0
        %1419 = vmatprep.subr.mxu0 0.0
        %1420 = vmatpush1.msra.mxu0 0.0
        %1421 = vmatprep.subr.mxu0 0.0
        %1422 = vmatpush1.msra.mxu0 0.0
        %1423 = vmatprep.subr.mxu0 0.0
        %1424 = vmatpush1.msra.mxu0 0.0
        %1425 = vmatprep.mubr.f32.mxu0 %v1350
        %1426 = vmatmul.mubr.f32.gmra.mrb[0].mxu0 %v1262
        %v1427 = vpop.f32.mrb[0].mxu0
        %v1428 = vadd.f32 %v1331, %v1427
        %v1429 = vpop.f32.mrb[0].mxu0
        %v1430 = vadd.f32 %v1331, %v1429
        %1431 = vmatprep.mubr.f32.mxu0 %v1353
        %1432 = vmatmul.mubr.f32.gmra.mrb[0].mxu0 %v1264
        %v1433 = vpop.f32.mrb[0].mxu0
        %v1434 = vadd.f32 %v1336, %v1433
        %v1435 = vpop.f32.mrb[0].mxu0
        %v1436 = vadd.f32 %v1336, %v1435
        %1437 = vmatprep.mubr.f32.mxu0 %v1356
        %1438 = vmatmul.mubr.f32.gmra.mrb[0].mxu0 %v1266
        %v1439 = vpop.f32.mrb[0].mxu0
        %v1440 = vadd.f32 %v1341, %v1439
        %v1441 = vpop.f32.mrb[0].mxu0
        %v1442 = vadd.f32 %v1341, %v1441
        %1443 = vmatprep.mubr.f32.mxu0 %v1359
        %1444 = vmatmul.mubr.f32.gmra.mrb[0].mxu0 %v1268
        %v1445 = vpop.f32.mrb[0].mxu0
        %v1446 = vadd.f32 %v1346, %v1445
        %v1447 = vpop.f32.mrb[0].mxu0
        %v1448 = vadd.f32 %v1346, %v1447
        %1449 = vdwg.mxu0
        %1450 = vmatprep.subr.mxu0 0.0
        %1451 = vmatpush1.msra.mxu0 %v1272
        %1452 = vmatprep.subr.mxu0 0.0
        %1453 = vmatpush1.msra.mxu0 %v1275
        %1454 = vmatprep.subr.mxu0 0.0
        %1455 = vmatpush1.msra.mxu0 %v1278
        %1456 = vmatprep.subr.mxu0 0.0
        %1457 = vmatpush1.msra.mxu0 %v1281
        %1458 = vmatprep.subr.mxu0 0.0
        %1459 = vmatpush1.msra.mxu0 %v1284
        %1460 = vmatprep.subr.mxu0 0.0
        %1461 = vmatpush1.msra.mxu0 %v1287
        %1462 = vmatprep.subr.mxu0 0.0
        %1463 = vmatpush1.msra.mxu0 %v1290
        %1464 = vmatprep.subr.mxu0 0.0
        %1465 = vmatpush1.msra.mxu0 %v1293
        %1466 = vmatprep.subr.mxu0 0.0
        %1467 = vmatpush1.msra.mxu0 %v1296
        %1468 = vmatprep.subr.mxu0 0.0
        %1469 = vmatpush1.msra.mxu0 %v1299
        %1470 = vmatprep.subr.mxu0 0.0
        %1471 = vmatpush1.msra.mxu0 %v1302
        %1472 = vmatprep.subr.mxu0 0.0
        %1473 = vmatpush1.msra.mxu0 %v1305
        %1474 = vmatprep.subr.mxu0 0.0
        %1475 = vmatpush1.msra.mxu0 %v1308
        %1476 = vmatprep.subr.mxu0 0.0
        %1477 = vmatpush1.msra.mxu0 %v1311
        %1478 = vmatprep.subr.mxu0 0.0
        %1479 = vmatpush1.msra.mxu0 %v1314
        %1480 = vmatprep.subr.mxu0 0.0
        %1481 = vmatpush1.msra.mxu0 %v1317
        %1482 = vmatprep.subr.mxu0 0.0
        %1483 = vmatpush1.msra.mxu0 %v1320
        %1484 = vmatprep.subr.mxu0 0.0
        %1485 = vmatpush1.msra.mxu0 %v1323
        %1486 = vmatprep.subr.mxu0 0.0
        %1487 = vmatpush1.msra.mxu0 0.0
        %1488 = vmatprep.subr.mxu0 0.0
        %1489 = vmatpush1.msra.mxu0 0.0
        %1490 = vmatprep.subr.mxu0 0.0
        %1491 = vmatpush1.msra.mxu0 0.0
        %1492 = vmatprep.subr.mxu0 0.0
        %1493 = vmatpush1.msra.mxu0 0.0
        %1494 = vmatprep.subr.mxu0 0.0
        %1495 = vmatpush1.msra.mxu0 0.0
        %1496 = vmatprep.subr.mxu0 0.0
        %1497 = vmatpush1.msra.mxu0 0.0
        %1498 = vmatprep.subr.mxu0 0.0
        %1499 = vmatpush1.msra.mxu0 0.0
        %1500 = vmatprep.subr.mxu0 0.0
        %1501 = vmatpush1.msra.mxu0 0.0
        %1502 = vmatprep.subr.mxu0 0.0
        %1503 = vmatpush1.msra.mxu0 0.0
        %1504 = vmatprep.subr.mxu0 0.0
        %1505 = vmatpush1.msra.mxu0 0.0
        %1506 = vmatprep.subr.mxu0 0.0
        %1507 = vmatpush1.msra.mxu0 0.0
        %1508 = vmatprep.subr.mxu0 0.0
        %1509 = vmatpush1.msra.mxu0 0.0
        %1510 = vmatprep.subr.mxu0 0.0
        %1511 = vmatpush1.msra.mxu0 0.0
        %1512 = vmatprep.subr.mxu0 0.0
        %1513 = vmatpush1.msra.mxu0 0.0
        %1514 = vmatprep.mubr.f32.mxu0 %v1350
        %1515 = vmatmul.mubr.f32.gmra.mrb[0].mxu0 %v1262
        %v1516 = vpop.f32.mrb[0].mxu0
        %v1517 = vadd.f32 %v1331, %v1516
        %v1518 = vpop.f32.mrb[0].mxu0
        %1519 = vmatprep.mubr.f32.mxu0 %v1353
        %1520 = vmatmul.mubr.f32.gmra.mrb[0].mxu0 %v1264
        %v1521 = vpop.f32.mrb[0].mxu0
        %v1522 = vadd.f32 %v1336, %v1521
        %v1523 = vpop.f32.mrb[0].mxu0
        %1524 = vmatprep.mubr.f32.mxu0 %v1356
        %1525 = vmatmul.mubr.f32.gmra.mrb[0].mxu0 %v1266
        %v1526 = vpop.f32.mrb[0].mxu0
        %v1527 = vadd.f32 %v1341, %v1526
        %v1528 = vpop.f32.mrb[0].mxu0
        %1529 = vmatprep.mubr.f32.mxu0 %v1359
        %1530 = vmatmul.mubr.f32.gmra.mrb[0].mxu0 %v1268
        %v1531 = vpop.f32.mrb[0].mxu0
        %v1532 = vadd.f32 %v1346, %v1531
        %v1533 = vpop.f32.mrb[0].mxu0
        %1534 = vdwg.mxu0
        %v1535 = vxor.u32 %v1428, 2147483648
        %v1536 = vxor.u32 %v1430, 2147483648
        %v1537 = vxor.u32 %v1517, 2147483648
        %v1538 = vxor.u32 %v1434, 2147483648
        %v1539 = vxor.u32 %v1436, 2147483648
        %v1540 = vxor.u32 %v1522, 2147483648
        %v1541 = vxor.u32 %v1440, 2147483648
        %v1542 = vxor.u32 %v1442, 2147483648
        %v1543 = vxor.u32 %v1527, 2147483648
        %v1544 = vxor.u32 %v1446, 2147483648
        %v1545 = vxor.u32 %v1448, 2147483648
        %v1546 = vxor.u32 %v1532, 2147483648
        %v1547 = vmul.f32 %v1535, 1.442695
        %v1548 = vpow.pop %v1547
        %v1549 = vmul.f32 %v1536, 1.442695
        %v1550 = vpow.pop %v1549
        %v1551 = vmul.f32 %v1537, 1.442695
        %v1552 = vpow.pop %v1551
        %v1553 = vmul.f32 %v1538, 1.442695
        %v1554 = vpow.pop %v1553
        %v1555 = vmul.f32 %v1539, 1.442695
        %v1556 = vpow.pop %v1555
        %v1557 = vmul.f32 %v1540, 1.442695
        %v1558 = vpow.pop %v1557
        %v1559 = vmul.f32 %v1541, 1.442695
        %v1560 = vpow.pop %v1559
        %v1561 = vmul.f32 %v1542, 1.442695
        %v1562 = vpow.pop %v1561
        %v1563 = vmul.f32 %v1543, 1.442695
        %v1564 = vpow.pop %v1563
        %v1565 = vmul.f32 %v1544, 1.442695
        %v1566 = vpow.pop %v1565
        %v1567 = vmul.f32 %v1545, 1.442695
        %v1568 = vpow.pop %v1567
        %v1569 = vmul.f32 %v1546, 1.442695
        %v1570 = vpow.pop %v1569
        %v1571 = vadd.f32 %v1548, 1.0
        %v1572 = vadd.f32 %v1550, 1.0
        %v1573 = vadd.f32 %v1552, 1.0
        %v1574 = vadd.f32 %v1554, 1.0
        %v1575 = vadd.f32 %v1556, 1.0
        %v1576 = vadd.f32 %v1558, 1.0
        %v1577 = vadd.f32 %v1560, 1.0
        %v1578 = vadd.f32 %v1562, 1.0
        %v1579 = vadd.f32 %v1564, 1.0
        %v1580 = vadd.f32 %v1566, 1.0
        %v1581 = vadd.f32 %v1568, 1.0
        %v1582 = vadd.f32 %v1570, 1.0
        %v1583 = vrcp.pop %v1571
        %v1584 = vmul.f32 1.0, %v1583
        %v1585 = vrcp.pop %v1572
        %v1586 = vmul.f32 1.0, %v1585
        %v1587 = vrcp.pop %v1573
        %v1588 = vmul.f32 1.0, %v1587
        %v1589 = vrcp.pop %v1574
        %v1590 = vmul.f32 1.0, %v1589
        %v1591 = vrcp.pop %v1575
        %v1592 = vmul.f32 1.0, %v1591
        %v1593 = vrcp.pop %v1576
        %v1594 = vmul.f32 1.0, %v1593
        %v1595 = vrcp.pop %v1577
        %v1596 = vmul.f32 1.0, %v1595
        %v1597 = vrcp.pop %v1578
        %v1598 = vmul.f32 1.0, %v1597
        %v1599 = vrcp.pop %v1579
        %v1600 = vmul.f32 1.0, %v1599
        %v1601 = vrcp.pop %v1580
        %v1602 = vmul.f32 1.0, %v1601
        %v1603 = vrcp.pop %v1581
        %v1604 = vmul.f32 1.0, %v1603
        %v1605 = vrcp.pop %v1582
        %v1606 = vmul.f32 1.0, %v1605
        %v1607 = vld [vmem:[%s8] sm:$0xff]
        %v1608 = vld [vmem:[%s8 + $0x8] sm:$0xff]
        %v1609 = vld [vmem:[%s8 + $0x10] sm:$0xff]
        %v1610 = vld [vmem:[%s8 + $0x18] sm:$0xff]
        %v1611 = vld [vmem:[%s8 + $0x20] sm:$0xff]
        %v1612 = vld [vmem:[%s8 + $0x28] sm:$0xff]
        %v1613 = vld [vmem:[%s8 + $0x30] sm:$0xff]
        %v1614 = vld [vmem:[%s8 + $0x38] sm:$0xff]
        %v1615 = vld [vmem:[%s9] sm:$0xff]
        %v1616 = vld [vmem:[%s9 + $0x8] sm:$0xff]
        %v1617 = vld [vmem:[%s9 + $0x10] sm:$0xff]
        %v1618 = vld [vmem:[%s9 + $0x18] sm:$0xff]
        %v1619 = vld [vmem:[%s9 + $0x20] sm:$0xff]
        %v1620 = vld [vmem:[%s9 + $0x28] sm:$0xff]
        %v1621 = vld [vmem:[%s9 + $0x30] sm:$0xff]
        %v1622 = vld [vmem:[%s9 + $0x38] sm:$0xff]
        %1624 = vset.pattern.permute.xlu0 0
        %1625 = vperm.xlu0 %1624, %v1615
        %v1626 = vpop.permute.xlu0 %1625
        %1629 = vset.pattern.permute.xlu0 0
        %1630 = vperm.xlu0 %1629, %v1616
        %v1631 = vpop.permute.xlu0 %1630
        %1634 = vset.pattern.permute.xlu0 0
        %1635 = vperm.xlu0 %1634, %v1617
        %v1636 = vpop.permute.xlu0 %1635
        %1639 = vset.pattern.permute.xlu0 0
        %1640 = vperm.xlu0 %1639, %v1618
        %v1641 = vpop.permute.xlu0 %1640
        %1644 = vset.pattern.permute.xlu0 0
        %1645 = vperm.xlu0 %1644, %v1619
        %v1646 = vpop.permute.xlu0 %1645
        %1649 = vset.pattern.permute.xlu0 0
        %1650 = vperm.xlu0 %1649, %v1620
        %v1651 = vpop.permute.xlu0 %1650
        %1654 = vset.pattern.permute.xlu0 0
        %1655 = vperm.xlu0 %1654, %v1621
        %v1656 = vpop.permute.xlu0 %1655
        %1659 = vset.pattern.permute.xlu0 0
        %1660 = vperm.xlu0 %1659, %v1622
        %v1661 = vpop.permute.xlu0 %1660
        %v1664 = vsel %vm643, %v1607, 0
        %v1667 = vsel %vm643, %v1608, 0
        %v1670 = vsel %vm643, %v1609, 0
        %v1673 = vsel %vm643, %v1610, 0
        %v1676 = vsel %vm643, %v1611, 0
        %v1679 = vsel %vm643, %v1612, 0
        %v1682 = vsel %vm643, %v1613, 0
        %v1685 = vsel %vm643, %v1614, 0
        %1687 = vmatprep.subr.mxu0 %v1586
        %1688 = vmatpush1.msra.mxu0 %v1584
        %1689 = vmatprep.subr.mxu0 %v1592
        %1690 = vmatpush1.msra.mxu0 %v1590
        %1691 = vmatprep.subr.mxu0 %v1598
        %1692 = vmatpush1.msra.mxu0 %v1596
        %1693 = vmatprep.subr.mxu0 %v1604
        %1694 = vmatpush1.msra.mxu0 %v1602
        %1695 = vmatprep.subr.mxu0 0.0
        %1696 = vmatpush1.msra.mxu0 0.0
        %1697 = vmatprep.subr.mxu0 0.0
        %1698 = vmatpush1.msra.mxu0 0.0
        %1699 = vmatprep.subr.mxu0 0.0
        %1700 = vmatpush1.msra.mxu0 0.0
        %1701 = vmatprep.subr.mxu0 0.0
        %1702 = vmatpush1.msra.mxu0 0.0
        %1703 = vmatprep.subr.mxu0 0.0
        %1704 = vmatpush1.msra.mxu0 0.0
        %1705 = vmatprep.subr.mxu0 0.0
        %1706 = vmatpush1.msra.mxu0 0.0
        %1707 = vmatprep.subr.mxu0 0.0
        %1708 = vmatpush1.msra.mxu0 0.0
        %1709 = vmatprep.subr.mxu0 0.0
        %1710 = vmatpush1.msra.mxu0 0.0
        %1711 = vmatprep.subr.mxu0 0.0
        %1712 = vmatpush1.msra.mxu0 0.0
        %1713 = vmatprep.subr.mxu0 0.0
        %1714 = vmatpush1.msra.mxu0 0.0
        %1715 = vmatprep.subr.mxu0 0.0
        %1716 = vmatpush1.msra.mxu0 0.0
        %1717 = vmatprep.subr.mxu0 0.0
        %1718 = vmatpush1.msra.mxu0 0.0
        %1719 = vmatprep.subr.mxu0 0.0
        %1720 = vmatpush1.msra.mxu0 0.0
        %1721 = vmatprep.subr.mxu0 0.0
        %1722 = vmatpush1.msra.mxu0 0.0
        %1723 = vmatprep.subr.mxu0 0.0
        %1724 = vmatpush1.msra.mxu0 0.0
        %1725 = vmatprep.subr.mxu0 0.0
        %1726 = vmatpush1.msra.mxu0 0.0
        %1727 = vmatprep.subr.mxu0 0.0
        %1728 = vmatpush1.msra.mxu0 0.0
        %1729 = vmatprep.subr.mxu0 0.0
        %1730 = vmatpush1.msra.mxu0 0.0
        %1731 = vmatprep.subr.mxu0 0.0
        %1732 = vmatpush1.msra.mxu0 0.0
        %1733 = vmatprep.subr.mxu0 0.0
        %1734 = vmatpush1.msra.mxu0 0.0
        %1735 = vmatprep.subr.mxu0 0.0
        %1736 = vmatpush1.msra.mxu0 0.0
        %1737 = vmatprep.subr.mxu0 0.0
        %1738 = vmatpush1.msra.mxu0 0.0
        %1739 = vmatprep.subr.mxu0 0.0
        %1740 = vmatpush1.msra.mxu0 0.0
        %1741 = vmatprep.subr.mxu0 0.0
        %1742 = vmatpush1.msra.mxu0 0.0
        %1743 = vmatprep.subr.mxu0 0.0
        %1744 = vmatpush1.msra.mxu0 0.0
        %1745 = vmatprep.subr.mxu0 0.0
        %1746 = vmatpush1.msra.mxu0 0.0
        %1747 = vmatprep.subr.mxu0 0.0
        %1748 = vmatpush1.msra.mxu0 0.0
        %1749 = vmatprep.subr.mxu0 0.0
        %1750 = vmatpush1.msra.mxu0 0.0
        %1751 = vmatprep.mubr.f32.mxu0 0.0
        %1752 = vmatmul.mubr.f32.gmra.mrb[0].mxu0 %v1664
        %v1753 = vpop.f32.mrb[0].mxu0
        %v1754 = vadd.f32 %v1626, %v1753
        %v1755 = vpop.f32.mrb[0].mxu0
        %v1756 = vadd.f32 %v1626, %v1755
        %1757 = vmatprep.mubr.f32.mxu0 0.0
        %1758 = vmatmul.mubr.f32.gmra.mrb[0].mxu0 %v1667
        %v1759 = vpop.f32.mrb[0].mxu0
        %v1760 = vadd.f32 %v1631, %v1759
        %v1761 = vpop.f32.mrb[0].mxu0
        %v1762 = vadd.f32 %v1631, %v1761
        %1763 = vmatprep.mubr.f32.mxu0 0.0
        %1764 = vmatmul.mubr.f32.gmra.mrb[0].mxu0 %v1670
        %v1765 = vpop.f32.mrb[0].mxu0
        %v1766 = vadd.f32 %v1636, %v1765
        %v1767 = vpop.f32.mrb[0].mxu0
        %v1768 = vadd.f32 %v1636, %v1767
        %1769 = vmatprep.mubr.f32.mxu0 0.0
        %1770 = vmatmul.mubr.f32.gmra.mrb[0].mxu0 %v1673
        %v1771 = vpop.f32.mrb[0].mxu0
        %v1772 = vadd.f32 %v1641, %v1771
        %v1773 = vpop.f32.mrb[0].mxu0
        %v1774 = vadd.f32 %v1641, %v1773
        %1775 = vmatprep.mubr.f32.mxu0 0.0
        %1776 = vmatmul.mubr.f32.gmra.mrb[0].mxu0 %v1676
        %v1777 = vpop.f32.mrb[0].mxu0
        %v1778 = vadd.f32 %v1646, %v1777
        %v1779 = vpop.f32.mrb[0].mxu0
        %v1780 = vadd.f32 %v1646, %v1779
        %1781 = vmatprep.mubr.f32.mxu0 0.0
        %1782 = vmatmul.mubr.f32.gmra.mrb[0].mxu0 %v1679
        %v1783 = vpop.f32.mrb[0].mxu0
        %v1784 = vadd.f32 %v1651, %v1783
        %v1785 = vpop.f32.mrb[0].mxu0
        %v1786 = vadd.f32 %v1651, %v1785
        %1787 = vmatprep.mubr.f32.mxu0 0.0
        %1788 = vmatmul.mubr.f32.gmra.mrb[0].mxu0 %v1682
        %v1789 = vpop.f32.mrb[0].mxu0
        %v1790 = vadd.f32 %v1656, %v1789
        %v1791 = vpop.f32.mrb[0].mxu0
        %v1792 = vadd.f32 %v1656, %v1791
        %1793 = vmatprep.mubr.f32.mxu0 0.0
        %1794 = vmatmul.mubr.f32.gmra.mrb[0].mxu0 %v1685
        %v1795 = vpop.f32.mrb[0].mxu0
        %v1796 = vadd.f32 %v1661, %v1795
        %v1797 = vpop.f32.mrb[0].mxu0
        %v1798 = vadd.f32 %v1661, %v1797
        %1799 = vdwg.mxu0
        %1800 = vmatprep.subr.mxu0 0.0
        %1801 = vmatpush1.msra.mxu0 %v1588
        %1802 = vmatprep.subr.mxu0 0.0
        %1803 = vmatpush1.msra.mxu0 %v1594
        %1804 = vmatprep.subr.mxu0 0.0
        %1805 = vmatpush1.msra.mxu0 %v1600
        %1806 = vmatprep.subr.mxu0 0.0
        %1807 = vmatpush1.msra.mxu0 %v1606
        %1808 = vmatprep.subr.mxu0 0.0
        %1809 = vmatpush1.msra.mxu0 0.0
        %1810 = vmatprep.subr.mxu0 0.0
        %1811 = vmatpush1.msra.mxu0 0.0
        %1812 = vmatprep.subr.mxu0 0.0
        %1813 = vmatpush1.msra.mxu0 0.0
        %1814 = vmatprep.subr.mxu0 0.0
        %1815 = vmatpush1.msra.mxu0 0.0
        %1816 = vmatprep.subr.mxu0 0.0
        %1817 = vmatpush1.msra.mxu0 0.0
        %1818 = vmatprep.subr.mxu0 0.0
        %1819 = vmatpush1.msra.mxu0 0.0
        %1820 = vmatprep.subr.mxu0 0.0
        %1821 = vmatpush1.msra.mxu0 0.0
        %1822 = vmatprep.subr.mxu0 0.0
        %1823 = vmatpush1.msra.mxu0 0.0
        %1824 = vmatprep.subr.mxu0 0.0
        %1825 = vmatpush1.msra.mxu0 0.0
        %1826 = vmatprep.subr.mxu0 0.0
        %1827 = vmatpush1.msra.mxu0 0.0
        %1828 = vmatprep.subr.mxu0 0.0
        %1829 = vmatpush1.msra.mxu0 0.0
        %1830 = vmatprep.subr.mxu0 0.0
        %1831 = vmatpush1.msra.mxu0 0.0
        %1832 = vmatprep.subr.mxu0 0.0
        %1833 = vmatpush1.msra.mxu0 0.0
        %1834 = vmatprep.subr.mxu0 0.0
        %1835 = vmatpush1.msra.mxu0 0.0
        %1836 = vmatprep.subr.mxu0 0.0
        %1837 = vmatpush1.msra.mxu0 0.0
        %1838 = vmatprep.subr.mxu0 0.0
        %1839 = vmatpush1.msra.mxu0 0.0
        %1840 = vmatprep.subr.mxu0 0.0
        %1841 = vmatpush1.msra.mxu0 0.0
        %1842 = vmatprep.subr.mxu0 0.0
        %1843 = vmatpush1.msra.mxu0 0.0
        %1844 = vmatprep.subr.mxu0 0.0
        %1845 = vmatpush1.msra.mxu0 0.0
        %1846 = vmatprep.subr.mxu0 0.0
        %1847 = vmatpush1.msra.mxu0 0.0
        %1848 = vmatprep.subr.mxu0 0.0
        %1849 = vmatpush1.msra.mxu0 0.0
        %1850 = vmatprep.subr.mxu0 0.0
        %1851 = vmatpush1.msra.mxu0 0.0
        %1852 = vmatprep.subr.mxu0 0.0
        %1853 = vmatpush1.msra.mxu0 0.0
        %1854 = vmatprep.subr.mxu0 0.0
        %1855 = vmatpush1.msra.mxu0 0.0
        %1856 = vmatprep.subr.mxu0 0.0
        %1857 = vmatpush1.msra.mxu0 0.0
        %1858 = vmatprep.subr.mxu0 0.0
        %1859 = vmatpush1.msra.mxu0 0.0
        %1860 = vmatprep.subr.mxu0 0.0
        %1861 = vmatpush1.msra.mxu0 0.0
        %1862 = vmatprep.subr.mxu0 0.0
        %1863 = vmatpush1.msra.mxu0 0.0
        %1864 = vmatprep.mubr.f32.mxu0 0.0
        %1865 = vmatmul.mubr.f32.gmra.mrb[0].mxu0 %v1664
        %v1866 = vpop.f32.mrb[0].mxu0
        %v1867 = vadd.f32 %v1626, %v1866
        %v1868 = vpop.f32.mrb[0].mxu0
        %1869 = vmatprep.mubr.f32.mxu0 0.0
        %1870 = vmatmul.mubr.f32.gmra.mrb[0].mxu0 %v1667
        %v1871 = vpop.f32.mrb[0].mxu0
        %v1872 = vadd.f32 %v1631, %v1871
        %v1873 = vpop.f32.mrb[0].mxu0
        %1874 = vmatprep.mubr.f32.mxu0 0.0
        %1875 = vmatmul.mubr.f32.gmra.mrb[0].mxu0 %v1670
        %v1876 = vpop.f32.mrb[0].mxu0
        %v1877 = vadd.f32 %v1636, %v1876
        %v1878 = vpop.f32.mrb[0].mxu0
        %1879 = vmatprep.mubr.f32.mxu0 0.0
        %1880 = vmatmul.mubr.f32.gmra.mrb[0].mxu0 %v1673
        %v1881 = vpop.f32.mrb[0].mxu0
        %v1882 = vadd.f32 %v1641, %v1881
        %v1883 = vpop.f32.mrb[0].mxu0
        %1884 = vmatprep.mubr.f32.mxu0 0.0
        %1885 = vmatmul.mubr.f32.gmra.mrb[0].mxu0 %v1676
        %v1886 = vpop.f32.mrb[0].mxu0
        %v1887 = vadd.f32 %v1646, %v1886
        %v1888 = vpop.f32.mrb[0].mxu0
        %1889 = vmatprep.mubr.f32.mxu0 0.0
        %1890 = vmatmul.mubr.f32.gmra.mrb[0].mxu0 %v1679
        %v1891 = vpop.f32.mrb[0].mxu0
        %v1892 = vadd.f32 %v1651, %v1891
        %v1893 = vpop.f32.mrb[0].mxu0
        %1894 = vmatprep.mubr.f32.mxu0 0.0
        %1895 = vmatmul.mubr.f32.gmra.mrb[0].mxu0 %v1682
        %v1896 = vpop.f32.mrb[0].mxu0
        %v1897 = vadd.f32 %v1656, %v1896
        %v1898 = vpop.f32.mrb[0].mxu0
        %1899 = vmatprep.mubr.f32.mxu0 0.0
        %1900 = vmatmul.mubr.f32.gmra.mrb[0].mxu0 %v1685
        %v1901 = vpop.f32.mrb[0].mxu0
        %v1902 = vadd.f32 %v1661, %v1901
        %v1903 = vpop.f32.mrb[0].mxu0
        %1904 = vdwg.mxu0
        %v1905 = vxor.u32 %v1754, 2147483648
        %v1906 = vxor.u32 %v1756, 2147483648
        %v1907 = vxor.u32 %v1867, 2147483648
        %v1908 = vxor.u32 %v1760, 2147483648
        %v1909 = vxor.u32 %v1762, 2147483648
        %v1910 = vxor.u32 %v1872, 2147483648
        %v1911 = vxor.u32 %v1766, 2147483648
        %v1912 = vxor.u32 %v1768, 2147483648
        %v1913 = vxor.u32 %v1877, 2147483648
        %v1914 = vxor.u32 %v1772, 2147483648
        %v1915 = vxor.u32 %v1774, 2147483648
        %v1916 = vxor.u32 %v1882, 2147483648
        %v1917 = vxor.u32 %v1778, 2147483648
        %v1918 = vxor.u32 %v1780, 2147483648
        %v1919 = vxor.u32 %v1887, 2147483648
        %v1920 = vxor.u32 %v1784, 2147483648
        %v1921 = vxor.u32 %v1786, 2147483648
        %v1922 = vxor.u32 %v1892, 2147483648
        %v1923 = vxor.u32 %v1790, 2147483648
        %v1924 = vxor.u32 %v1792, 2147483648
        %v1925 = vxor.u32 %v1897, 2147483648
        %v1926 = vxor.u32 %v1796, 2147483648
        %v1927 = vxor.u32 %v1798, 2147483648
        %v1928 = vxor.u32 %v1902, 2147483648
        %v1929 = vmul.f32 %v1905, 1.442695
        %v1930 = vpow.pop %v1929
        %v1931 = vmul.f32 %v1906, 1.442695
        %v1932 = vpow.pop %v1931
        %v1933 = vmul.f32 %v1907, 1.442695
        %v1934 = vpow.pop %v1933
        %v1935 = vmul.f32 %v1908, 1.442695
        %v1936 = vpow.pop %v1935
        %v1937 = vmul.f32 %v1909, 1.442695
        %v1938 = vpow.pop %v1937
        %v1939 = vmul.f32 %v1910, 1.442695
        %v1940 = vpow.pop %v1939
        %v1941 = vmul.f32 %v1911, 1.442695
        %v1942 = vpow.pop %v1941
        %v1943 = vmul.f32 %v1912, 1.442695
        %v1944 = vpow.pop %v1943
        %v1945 = vmul.f32 %v1913, 1.442695
        %v1946 = vpow.pop %v1945
        %v1947 = vmul.f32 %v1914, 1.442695
        %v1948 = vpow.pop %v1947
        %v1949 = vmul.f32 %v1915, 1.442695
        %v1950 = vpow.pop %v1949
        %v1951 = vmul.f32 %v1916, 1.442695
        %v1952 = vpow.pop %v1951
        %v1953 = vmul.f32 %v1917, 1.442695
        %v1954 = vpow.pop %v1953
        %v1955 = vmul.f32 %v1918, 1.442695
        %v1956 = vpow.pop %v1955
        %v1957 = vmul.f32 %v1919, 1.442695
        %v1958 = vpow.pop %v1957
        %v1959 = vmul.f32 %v1920, 1.442695
        %v1960 = vpow.pop %v1959
        %v1961 = vmul.f32 %v1921, 1.442695
        %v1962 = vpow.pop %v1961
        %v1963 = vmul.f32 %v1922, 1.442695
        %v1964 = vpow.pop %v1963
        %v1965 = vmul.f32 %v1923, 1.442695
        %v1966 = vpow.pop %v1965
        %v1967 = vmul.f32 %v1924, 1.442695
        %v1968 = vpow.pop %v1967
        %v1969 = vmul.f32 %v1925, 1.442695
        %v1970 = vpow.pop %v1969
        %v1971 = vmul.f32 %v1926, 1.442695
        %v1972 = vpow.pop %v1971
        %v1973 = vmul.f32 %v1927, 1.442695
        %v1974 = vpow.pop %v1973
        %v1975 = vmul.f32 %v1928, 1.442695
        %v1976 = vpow.pop %v1975
        %v1977 = vadd.f32 %v1930, 1.0
        %v1978 = vadd.f32 %v1932, 1.0
        %v1979 = vadd.f32 %v1934, 1.0
        %v1980 = vadd.f32 %v1936, 1.0
        %v1981 = vadd.f32 %v1938, 1.0
        %v1982 = vadd.f32 %v1940, 1.0
        %v1983 = vadd.f32 %v1942, 1.0
        %v1984 = vadd.f32 %v1944, 1.0
        %v1985 = vadd.f32 %v1946, 1.0
        %v1986 = vadd.f32 %v1948, 1.0
        %v1987 = vadd.f32 %v1950, 1.0
        %v1988 = vadd.f32 %v1952, 1.0
        %v1989 = vadd.f32 %v1954, 1.0
        %v1990 = vadd.f32 %v1956, 1.0
        %v1991 = vadd.f32 %v1958, 1.0
        %v1992 = vadd.f32 %v1960, 1.0
        %v1993 = vadd.f32 %v1962, 1.0
        %v1994 = vadd.f32 %v1964, 1.0
        %v1995 = vadd.f32 %v1966, 1.0
        %v1996 = vadd.f32 %v1968, 1.0
        %v1997 = vadd.f32 %v1970, 1.0
        %v1998 = vadd.f32 %v1972, 1.0
        %v1999 = vadd.f32 %v1974, 1.0
        %v2000 = vadd.f32 %v1976, 1.0
        %v2001 = vrcp.pop %v1977
        %v2002 = vmul.f32 1.0, %v2001
        %v2003 = vrcp.pop %v1978
        %v2004 = vmul.f32 1.0, %v2003
        %v2005 = vrcp.pop %v1979
        %v2006 = vmul.f32 1.0, %v2005
        %v2007 = vrcp.pop %v1980
        %v2008 = vmul.f32 1.0, %v2007
        %v2009 = vrcp.pop %v1981
        %v2010 = vmul.f32 1.0, %v2009
        %v2011 = vrcp.pop %v1982
        %v2012 = vmul.f32 1.0, %v2011
        %v2013 = vrcp.pop %v1983
        %v2014 = vmul.f32 1.0, %v2013
        %v2015 = vrcp.pop %v1984
        %v2016 = vmul.f32 1.0, %v2015
        %v2017 = vrcp.pop %v1985
        %v2018 = vmul.f32 1.0, %v2017
        %v2019 = vrcp.pop %v1986
        %v2020 = vmul.f32 1.0, %v2019
        %v2021 = vrcp.pop %v1987
        %v2022 = vmul.f32 1.0, %v2021
        %v2023 = vrcp.pop %v1988
        %v2024 = vmul.f32 1.0, %v2023
        %v2025 = vrcp.pop %v1989
        %v2026 = vmul.f32 1.0, %v2025
        %v2027 = vrcp.pop %v1990
        %v2028 = vmul.f32 1.0, %v2027
        %v2029 = vrcp.pop %v1991
        %v2030 = vmul.f32 1.0, %v2029
        %v2031 = vrcp.pop %v1992
        %v2032 = vmul.f32 1.0, %v2031
        %v2033 = vrcp.pop %v1993
        %v2034 = vmul.f32 1.0, %v2033
        %v2035 = vrcp.pop %v1994
        %v2036 = vmul.f32 1.0, %v2035
        %v2037 = vrcp.pop %v1995
        %v2038 = vmul.f32 1.0, %v2037
        %v2039 = vrcp.pop %v1996
        %v2040 = vmul.f32 1.0, %v2039
        %v2041 = vrcp.pop %v1997
        %v2042 = vmul.f32 1.0, %v2041
        %v2043 = vrcp.pop %v1998
        %v2044 = vmul.f32 1.0, %v2043
        %v2045 = vrcp.pop %v1999
        %v2046 = vmul.f32 1.0, %v2045
        %v2047 = vrcp.pop %v2000
        %v2048 = vmul.f32 1.0, %v2047
        %2049 = vst [vmem:[%s389] sm:$0xff] %v2002
        %2050 = vst [vmem:[%s389 + $0x8] sm:$0xff] %v2004
        %2051 = vst.msk [vmem:[%s389 + $0x10] sm:$0xff] %vm899, %v2006
        %2052 = vst [vmem:[%s389 + $0x18] sm:$0xff] %v2008
        %2053 = vst [vmem:[%s389 + $0x20] sm:$0xff] %v2010
        %2054 = vst.msk [vmem:[%s389 + $0x28] sm:$0xff] %vm899, %v2012
        %2055 = vst [vmem:[%s389 + $0x30] sm:$0xff] %v2014
        %2056 = vst [vmem:[%s389 + $0x38] sm:$0xff] %v2016
        %2057 = vst.msk [vmem:[%s389 + $0x40] sm:$0xff] %vm899, %v2018
        %2058 = vst [vmem:[%s389 + $0x48] sm:$0xff] %v2020
        %2059 = vst [vmem:[%s389 + $0x50] sm:$0xff] %v2022
        %2060 = vst.msk [vmem:[%s389 + $0x58] sm:$0xff] %vm899, %v2024
        %2061 = vst [vmem:[%s389 + $0x60] sm:$0xff] %v2026
        %2062 = vst [vmem:[%s389 + $0x68] sm:$0xff] %v2028
        %2063 = vst.msk [vmem:[%s389 + $0x70] sm:$0xff] %vm899, %v2030
        %2064 = vst [vmem:[%s389 + $0x78] sm:$0xff] %v2032
        %2065 = vst [vmem:[%s389 + $0x80] sm:$0xff] %v2034
        %2066 = vst.msk [vmem:[%s389 + $0x88] sm:$0xff] %vm899, %v2036
        %2067 = vst [vmem:[%s389 + $0x90] sm:$0xff] %v2038
        %2068 = vst [vmem:[%s389 + $0x98] sm:$0xff] %v2040
        %2069 = vst.msk [vmem:[%s389 + $0xa0] sm:$0xff] %vm899, %v2042
        %2070 = vst [vmem:[%s389 + $0xa8] sm:$0xff] %v2044
        %2071 = vst [vmem:[%s389 + $0xb0] sm:$0xff] %v2046
        %2072 = vst.msk [vmem:[%s389 + $0xb8] sm:$0xff] %vm899, %v2048
        %p2073 = scmp.lt.s32.totalorder %s23, 1
        %s2074 = scalar_select %p2073, %s23, 1
        %s2075 = smul.addr %s2074, 24
        %s2076 = smul.addr %s2075, 8
        %s2077 = scalar_lea.vmem %s10, %s2076
        // Predicated region
        $region69: #{_forward_impl.1} parent=59 // pred_check
          %p2078 = pneg %p256
        $region70: #{_forward_impl.1} parent=59 // pred_check_branch
          %2080 = sbr.rel (%p2078) target = $region72
        $region71: #{_forward_impl.1} parent=59 // pred_region
          _
        $region72: #{_forward_impl.1} parent=59 // pred_fallthru
          _
      $region60: #{_forward_impl.1} parent=5 // pred_fallthru
        _
      %p2081 = scmp.le.s32.totalorder 2, %s18
      // Predicated region
      $region73: #{_forward_impl.1} parent=5 // pred_check
        %p2082 = pneg %p2081
      $region74: #{_forward_impl.1} parent=5 // pred_check_branch
        %2084 = sbr.rel (%p2082) target = $region76
      $region75: #{_forward_impl.1} parent=5 // pred_region
        %s2085 = ssub.s32 %s18, 2
        // Predicated region
        $region77: #{_forward_impl.1} parent=75 // pred_check
          %p2086 = pneg %p262
        $region78: #{_forward_impl.1} parent=75 // pred_check_branch
          %2088 = sbr.rel (%p2086) target = $region80
        $region79: #{_forward_impl.1} parent=75 // pred_region
          %p2089 = scmp.lt.s32.totalorder %s24, 1
          %s2090 = scalar_select %p2089, %s24, 1
          %s2091 = smul.addr %s2090, 24
          %s2092 = smul.addr %s2091, 8
          %s2093 = scalar_lea.vmem %s10, %s2092
        $region80: #{_forward_impl.1} parent=75 // pred_fallthru
          _
      $region76: #{_forward_impl.1} parent=5 // pred_fallthru
        _
    $region6: #{_forward_impl.1} parent=1 // loop_footer
      %s22 = sadd.s32 1, %s18
    $region7: #{_forward_impl.1} parent=1 // loop_footer_branch
      %17 = sbr.rel target = $region3
    $region8: #{_forward_impl.1} parent=1 // loop_exit
      _
    %2094 = vsyncpa [#allocation5], 1
    %s2095 = scalar_lea.sflag [#allocation5], 1
    %2096 = vsyncpa %s2095, 1
    %2097 = vsyncpa [#allocation7], 1

</llo_original>
